<compile_context>
chip_gen: v7x
topology: tpu7x:2x2x1
jax: 0.10.0
libtpu: 0.0.40
codegen_flags: <defaults>
</compile_context>

<pallas_src>
import functools

import jax
import jax.numpy as jnp
from jax.scipy.special import erf as _erf_ref
from jax.experimental import pallas as pl
from jax.experimental.pallas import tpu as pltpu

_SQRT1_2 = 0.7071067811865476
_WEIGHT_VMEM_BUDGET = 20 << 20  # conservative resident-weight budget (fits v7x 64 MiB)

# Cached answer to "does this JAX accept pipeline_mode=pl.Buffered(1)?"
_SINGLE_BUFFER_OK = None


# --------------------------------------------------------------------------- #
# Elementwise GELU (exact, erf-based — PyTorch nn.GELU() default)
# --------------------------------------------------------------------------- #
def _erf_approx(x, approx_recip):
    """erf via Abramowitz & Stegun 7.1.26 (max abs err ~1.5e-7), VPU/EUP only."""
    a1 = 0.254829592
    a2 = -0.284496736
    a3 = 1.421413741
    a4 = -1.453152027
    a5 = 1.061405429
    p = 0.3275911
    ax = jnp.abs(x)
    denom = 1.0 + p * ax
    if approx_recip:
        t = pl.reciprocal(denom, approx=True)   # EUP slot, frees VALU
    else:
        t = 1.0 / denom
    poly = ((((a5 * t + a4) * t + a3) * t + a2) * t + a1) * t
    y = 1.0 - poly * jnp.exp(-(ax * ax))
    return jnp.where(x >= 0, y, -y)


def _gelu(x, *, mode, approx_recip):
    if mode == "tanh":
        c = 0.7978845608028654  # sqrt(2/pi)
        return 0.5 * x * (1.0 + jnp.tanh(c * (x + 0.044715 * x * x * x)))
    return 0.5 * x * (1.0 + _erf_approx(x * _SQRT1_2, approx_recip))


# --------------------------------------------------------------------------- #
# Kernel
# --------------------------------------------------------------------------- #
def _ffn_kernel(x_ref, w1t_ref, b1_ref, w2t_ref, b2_ref, o_ref, acc_ref, *,
                gelu_mode, approx_reciprocal):
    """Grid = (row tiles, hidden tiles).

    x_ref   : (TM, D)   input rows (native dtype; cast to MXU dtype in-kernel)
    w1t_ref : (D, TH)   first Linear weight block, (in, out) layout
    b1_ref  : (1, TH)   first Linear bias block (f32)
    w2t_ref : (TH, D)   second Linear weight block, (in, out) layout
    b2_ref  : (1, D)    second Linear bias (f32)
    o_ref   : (TM, D)   output rows
    acc_ref : (TM, D)   f32 accumulator for the second matmul's partial sums
    """
    h_idx = pl.program_id(1)

    @pl.when(h_idx == 0)
    def _init():
        acc_ref[...] = jnp.zeros_like(acc_ref)

    # Linear 1 (one MXU pass over this hidden block), f32 accumulation.
    x = x_ref[...].astype(w1t_ref.dtype)
    h = jnp.dot(x, w1t_ref[...], preferred_element_type=jnp.float32)
    h = h + b1_ref[...]

    # Exact (erf) GELU in f32 — elementwise, so per-hidden-block is correct.
    h = _gelu(h, mode=gelu_mode, approx_recip=approx_reciprocal)

    # Linear 2 partial sum over this hidden block, f32 accumulation.
    acc_ref[...] += jnp.dot(h.astype(w2t_ref.dtype), w2t_ref[...],
                            preferred_element_type=jnp.float32)

    @pl.when(h_idx == pl.num_programs(1) - 1)
    def _finalize():
        o_ref[...] = (acc_ref[...] + b2_ref[...]).astype(o_ref.dtype)


# --------------------------------------------------------------------------- #
# Parameter packing (do ONCE, outside the forward path)
# --------------------------------------------------------------------------- #
def pack_feedforward_params(w1, b1, w2, b2, *, compute_dtype=jnp.bfloat16):
    """Repack PyTorch-layout FeedForward params for the kernel.

    w1 : (H, D), b1 : (H,)   -- nn.Linear(dim, mlp_dim)
    w2 : (D, H), b2 : (D,)   -- nn.Linear(mlp_dim, dim)
    compute_dtype: MXU operand dtype (bf16 default; pass jnp.float32 for exact
                   f32 matmuls). Accumulation / bias / GELU are always f32.
    """
    cd = w1.dtype if compute_dtype is None else compute_dtype
    w1t = jnp.transpose(jnp.asarray(w1)).astype(cd)            # (D, H)
    w2t = jnp.transpose(jnp.asarray(w2)).astype(cd)            # (H, D)
    b1r = jnp.asarray(b1).reshape(1, -1).astype(jnp.float32)   # (1, H)
    b2r = jnp.asarray(b2).reshape(1, -1).astype(jnp.float32)   # (1, D)
    return (w1t, b1r, w2t, b2r)


# --------------------------------------------------------------------------- #
# Tiling / VMEM sizing helpers
# --------------------------------------------------------------------------- #
def _round_up(x, m):
    return ((x + m - 1) // m) * m


def _pick_row_tile(M):
    if M >= 1024:
        return 256
    # For small / awkward M, aim for ~4 grid steps (megacore / v7x 2-TC split)
    # while staying a multiple of 8.
    return max(8, min(256, _round_up(pl.cdiv(M, 4), 8)))


def _pick_hidden_tile(H, D, w_itemsize, TM):
    """Largest hidden tile whose weight blocks + intermediates fit the budget."""
    if 2 * D * H * w_itemsize <= _WEIGHT_VMEM_BUDGET:
        return H  # both full weights stay resident in VMEM
    for th in (4096, 2048, 1024, 512, 256, 128):
        if th < H and H % th == 0:
            blk = 2 * (2 * D * th * w_itemsize) + TM * th * 4
            if blk <= _WEIGHT_VMEM_BUDGET:
                return th
    # TODO(synk): no 128-multiple divisor of H fits the budget; fall back to
    # fully-resident weights and rely on the raised vmem limit.
    return H


def _vmem_bytes(TM, D, TH, nh, x_itemsize, w_itemsize, out_itemsize, single_buf):
    w_bufs = 1 if (nh == 1 and single_buf) else 2
    return (2 * TM * D * x_itemsize            # input tiles (double-buffered)
            + 2 * TM * D * out_itemsize        # output tiles (double-buffered)
            + w_bufs * 2 * D * TH * w_itemsize # W1^T + W2^T blocks
            + w_bufs * (TH + D) * 4            # biases (f32)
            + TM * D * 4                       # f32 accumulator scratch
            + 2 * TM * TH * 4)                 # f32 hidden-activation temporaries


# --------------------------------------------------------------------------- #
# Forward pass
# --------------------------------------------------------------------------- #
def feedforward_pallas(x, packed_params, *, gelu_mode="exact",
                       approx_reciprocal=False):
    """FeedForward forward pass.

    x             : (..., D) input (any number of leading dims)
    packed_params : result of pack_feedforward_params(...)
    gelu_mode     : "exact" (erf, PyTorch default) or "tanh" (faster approx)
    approx_reciprocal : use EUP approx reciprocal inside erf (VALU-bound cases)
    """
    global _SINGLE_BUFFER_OK

    w1t, b1r, w2t, b2r = packed_params
    orig_shape = x.shape
    D = orig_shape[-1]
    H = w1t.shape[1]
    assert w1t.shape == (D, H) and w2t.shape == (H, D)
    assert b1r.shape == (1, H) and b2r.shape == (1, D)

    M = 1
    for s in orig_shape[:-1]:
        M *= s
    x2 = x.reshape(M, D)  # free contiguous reshape, no transpose / pad

    TM = _pick_row_tile(M)
    nm = pl.cdiv(M, TM)                       # ragged last block handled by Pallas
    w_itemsize = jnp.dtype(w1t.dtype).itemsize
    TH = _pick_hidden_tile(H, D, w_itemsize, TM)
    nh = H // TH

    est = _vmem_bytes(TM, D, TH, nh,
                      jnp.dtype(x2.dtype).itemsize, w_itemsize,
                      jnp.dtype(x.dtype).itemsize, single_buf=True)
    try:
        cap = int(pltpu.get_tpu_info().vmem_capacity_bytes)
    except Exception:
        cap = 64 << 20  # v7x per-core VMEM — the smallest of the three generations
    vmem_limit = max(int(1.5 * est), 32 << 20)
    vmem_limit = min(vmem_limit, int(0.85 * cap))
    vmem_limit = max(vmem_limit, est + (2 << 20))  # never below our own footprint

    kern = functools.partial(_ffn_kernel, gelu_mode=gelu_mode,
                             approx_reciprocal=approx_reciprocal)
    weights_const = (nh == 1)

    def run(single_buffer_resident):
        def resident_spec(shape, index_map, is_const):
            if single_buffer_resident and is_const:
                # Fetched once (constant index_map) -> no need for a double buffer.
                return pl.BlockSpec(shape, index_map, pipeline_mode=pl.Buffered(1))
            return pl.BlockSpec(shape, index_map)

        in_specs = [
            pl.BlockSpec((TM, D), lambda i, h: (i, 0)),                   # activations
            resident_spec((D, TH), lambda i, h: (0, h), weights_const),   # W1^T
            resident_spec((1, TH), lambda i, h: (0, h), weights_const),   # b1
            resident_spec((TH, D), lambda i, h: (h, 0), weights_const),   # W2^T
            resident_spec((1, D), lambda i, h: (0, 0), True),             # b2
        ]
        out_spec = pl.BlockSpec((TM, D), lambda i, h: (i, 0))

        return pl.pallas_call(
            kern,
            out_shape=jax.ShapeDtypeStruct((M, D), x.dtype),
            grid_spec=pltpu.PrefetchScalarGridSpec(
                num_scalar_prefetch=0,
                grid=(nm, nh),
                in_specs=in_specs,
                out_specs=out_spec,
                scratch_shapes=[pltpu.VMEM((TM, D), jnp.float32)],
            ),
            compiler_params=pltpu.CompilerParams(
                dimension_semantics=("parallel", "arbitrary"),
                vmem_limit_bytes=int(vmem_limit),
            ),
        )(x2, w1t, b1r, w2t, b2r)

    if _SINGLE_BUFFER_OK is None:
        try:
            out = run(True)
            _SINGLE_BUFFER_OK = True
        except Exception:
            _SINGLE_BUFFER_OK = False
            out = run(False)
    else:
        out = run(_SINGLE_BUFFER_OK)

    return out.reshape(orig_shape)


# --------------------------------------------------------------------------- #
# Pure-JAX reference (PyTorch semantics: exact erf GELU)
# --------------------------------------------------------------------------- #
def _reference(x, w1, b1, w2, b2, *, compute_dtype=None):
    if compute_dtype is None:
        h = jnp.matmul(x, w1.T) + b1
    else:
        h = jnp.matmul(x.astype(compute_dtype), w1.astype(compute_dtype).T,
                       preferred_element_type=jnp.float32) + b1
    g = 0.5 * h * (1.0 + _erf_ref(h * _SQRT1_2))
    if compute_dtype is None:
        y = jnp.matmul(g, w2.T) + b2
    else:
        y = jnp.matmul(g.astype(compute_dtype), w2.astype(compute_dtype).T,
                       preferred_element_type=jnp.float32) + b2
    return y.astype(x.dtype)


if __name__ == "__main__":
    # Small, lane-dense demo shapes: batch=2, seq=16, dim=128, mlp_dim=256.
    B, S, D, H = 2, 16, 128, 256

    key = jax.random.PRNGKey(0)
    kx, kw1, kb1, kw2, kb2 = jax.random.split(key, 5)
    x = jax.random.normal(kx, (B, S, D), jnp.float32)
    # PyTorch nn.Linear weight layout: (out_features, in_features).
    w1 = 0.1 * jax.random.normal(kw1, (H, D), jnp.float32)
    b1 = 0.1 * jax.random.normal(kb1, (H,), jnp.float32)
    w2 = 0.1 * jax.random.normal(kw2, (D, H), jnp.float32)
    b2 = 0.1 * jax.random.normal(kb2, (D,), jnp.float32)

    # Default path: bf16 MXU operands (pre-packed once), f32 accumulation.
    params_bf16 = pack_feedforward_params(w1, b1, w2, b2,
                                          compute_dtype=jnp.bfloat16)
    out_bf16 = jax.block_until_ready(feedforward_pallas(x, params_bf16))
    ref_bf16 = _reference(x, w1, b1, w2, b2, compute_dtype=jnp.bfloat16)
    assert out_bf16.shape == (B, S, D)
    assert out_bf16.dtype == x.dtype
    assert jnp.allclose(out_bf16, ref_bf16, atol=5e-3, rtol=5e-3), \
        "bf16-operand path mismatch vs matched-precision reference"

    # Full-f32 path: tight match against the PyTorch-semantics f32 reference.
    params_f32 = pack_feedforward_params(w1, b1, w2, b2,
                                         compute_dtype=jnp.float32)
    out_f32 = jax.block_until_ready(feedforward_pallas(x, params_f32))
    ref_f32 = _reference(x, w1, b1, w2, b2, compute_dtype=None)
    assert jnp.allclose(out_f32, ref_f32, atol=5e-4, rtol=5e-4), \
        "f32 path mismatch vs reference"

    print("KERNEL_OK")
</pallas_src>

<mosaic_0001>
module attributes {stable_mosaic.version = 11 : i64} {
  func.func @_ffn_kernel(%arg0: i32, %arg1: i32, %arg2: memref<8x128xf32, #tpu.memory_space<vmem>>, %arg3: memref<128x256xbf16, #tpu.memory_space<vmem>>, %arg4: memref<1x256xf32, #tpu.memory_space<vmem>>, %arg5: memref<256x128xbf16, #tpu.memory_space<vmem>>, %arg6: memref<1x128xf32, #tpu.memory_space<vmem>>, %arg7: memref<8x128xf32, #tpu.memory_space<vmem>>, %arg8: memref<8x128xf32, #tpu.memory_space<vmem>>) attributes {dimension_semantics = [#tpu.dimension_semantics<parallel>, #tpu.dimension_semantics<arbitrary>], iteration_bounds = array<i64: 4, 1>, scalar_prefetch = 0 : i64, scratch_operands = 1 : i64, tpu.core_type = #tpu.core_type<tc>, window_params = [{transform_indices = @transform_0, window_bounds = array<i64: 8, 128>}, {pipeline_mode = #tpu.pipeline_mode<synchronous>, transform_indices = @transform_1, window_bounds = array<i64: 128, 256>}, {pipeline_mode = #tpu.pipeline_mode<synchronous>, transform_indices = @transform_2, window_bounds = array<i64: 1, 256>}, {pipeline_mode = #tpu.pipeline_mode<synchronous>, transform_indices = @transform_3, window_bounds = array<i64: 256, 128>}, {pipeline_mode = #tpu.pipeline_mode<synchronous>, transform_indices = @transform_4, window_bounds = array<i64: 1, 128>}, {transform_indices = @transform_5, window_bounds = array<i64: 8, 128>}]} {
    %c0_i32 = arith.constant 0 : i32
    %0 = arith.cmpi eq, %arg1, %c0_i32 : i32
    %1 = arith.extui %0 : i1 to i32
    %c0_i32_0 = arith.constant 0 : i32
    %2 = arith.cmpi ne, %1, %c0_i32_0 : i32
    scf.if %2 {
      %cst_30 = arith.constant 0.000000e+00 : f32
      %59 = vector.broadcast %cst_30 : f32 to vector<8x128xf32>
      %c0_31 = arith.constant 0 : index
      %c0_32 = arith.constant 0 : index
      %60 = vector.load %arg8[%c0_31, %c0_32] : memref<8x128xf32, #tpu.memory_space<vmem>>, vector<8x128xf32>
      tpu.vector_store %arg8[%c0_31, %c0_32], %59 {strides = array<i32>} : memref<8x128xf32, #tpu.memory_space<vmem>>, vector<8x128xf32>,
    } else {
    }
    %c0 = arith.constant 0 : index
    %c0_1 = arith.constant 0 : index
    %3 = vector.load %arg2[%c0, %c0_1] : memref<8x128xf32, #tpu.memory_space<vmem>>, vector<8x128xf32>
    %4 = arith.truncf %3 : vector<8x128xf32> to vector<8x128xbf16>
    %c0_2 = arith.constant 0 : index
    %c0_3 = arith.constant 0 : index
    %5 = vector.load %arg3[%c0_2, %c0_3] : memref<128x256xbf16, #tpu.memory_space<vmem>>, vector<128x256xbf16>
    %cst = arith.constant dense<0.000000e+00> : vector<8x256xf32>
    %6 = tpu.matmul %4, %5, %cst {dimension_numbers = #tpu.dot_dimension_numbers<[1], [0], [0], [1], [0, 0, 1, 1], [], []>} : vector<8x128xbf16>, vector<128x256xbf16>, vector<8x256xf32> -> vector<8x256xf32>
    %c0_4 = arith.constant 0 : index
    %c0_5 = arith.constant 0 : index
    %7 = vector.load %arg4[%c0_4, %c0_5] : memref<1x256xf32, #tpu.memory_space<vmem>>, vector<1x256xf32>
    %8 = vector.broadcast %7 : vector<1x256xf32> to vector<8x256xf32>
    %9 = arith.addf %6, %8 : vector<8x256xf32>
    %cst_6 = arith.constant 5.000000e-01 : f32
    %10 = vector.broadcast %cst_6 : f32 to vector<8x256xf32>
    %11 = arith.mulf %10, %9 : vector<8x256xf32>
    %cst_7 = arith.constant 0.707106769 : f32
    %12 = vector.broadcast %cst_7 : f32 to vector<8x256xf32>
    %13 = arith.mulf %9, %12 : vector<8x256xf32>
    %14 = math.absf %13 : vector<8x256xf32>
    %cst_8 = arith.constant 0.327591091 : f32
    %15 = vector.broadcast %cst_8 : f32 to vector<8x256xf32>
    %16 = arith.mulf %15, %14 : vector<8x256xf32>
    %cst_9 = arith.constant 1.000000e+00 : f32
    %17 = vector.broadcast %cst_9 : f32 to vector<8x256xf32>
    %18 = arith.addf %17, %16 : vector<8x256xf32>
    %cst_10 = arith.constant 1.000000e+00 : f32
    %19 = vector.broadcast %cst_10 : f32 to vector<8x256xf32>
    %20 = arith.divf %19, %18 : vector<8x256xf32>
    %cst_11 = arith.constant 1.06140542 : f32
    %21 = vector.broadcast %cst_11 : f32 to vector<8x256xf32>
    %22 = arith.mulf %21, %20 : vector<8x256xf32>
    %cst_12 = arith.constant -1.45315206 : f32
    %23 = vector.broadcast %cst_12 : f32 to vector<8x256xf32>
    %24 = arith.addf %22, %23 : vector<8x256xf32>
    %25 = arith.mulf %24, %20 : vector<8x256xf32>
    %cst_13 = arith.constant 1.42141378 : f32
    %26 = vector.broadcast %cst_13 : f32 to vector<8x256xf32>
    %27 = arith.addf %25, %26 : vector<8x256xf32>
    %28 = arith.mulf %27, %20 : vector<8x256xf32>
    %cst_14 = arith.constant -0.284496725 : f32
    %29 = vector.broadcast %cst_14 : f32 to vector<8x256xf32>
    %30 = arith.addf %28, %29 : vector<8x256xf32>
    %31 = arith.mulf %30, %20 : vector<8x256xf32>
    %cst_15 = arith.constant 0.254829586 : f32
    %32 = vector.broadcast %cst_15 : f32 to vector<8x256xf32>
    %33 = arith.addf %31, %32 : vector<8x256xf32>
    %34 = arith.mulf %33, %20 : vector<8x256xf32>
    %35 = arith.mulf %14, %14 : vector<8x256xf32>
    %cst_16 = arith.constant 0.000000e+00 : f32
    %36 = vector.broadcast %cst_16 : f32 to vector<8x256xf32>
    %37 = arith.subf %36, %35 : vector<8x256xf32>
    %38 = math.exp %37 : vector<8x256xf32>
    %39 = arith.mulf %34, %38 : vector<8x256xf32>
    %cst_17 = arith.constant 1.000000e+00 : f32
    %40 = vector.broadcast %cst_17 : f32 to vector<8x256xf32>
    %41 = arith.subf %40, %39 : vector<8x256xf32>
    %cst_18 = arith.constant 0.000000e+00 : f32
    %42 = vector.broadcast %cst_18 : f32 to vector<8x256xf32>
    %43 = arith.cmpf oge, %13, %42 : vector<8x256xf32>
    %cst_19 = arith.constant 0.000000e+00 : f32
    %44 = vector.broadcast %cst_19 : f32 to vector<8x256xf32>
    %45 = arith.subf %44, %41 : vector<8x256xf32>
    %46 = arith.select %43, %41, %45 : vector<8x256xi1>, vector<8x256xf32>
    %cst_20 = arith.constant 1.000000e+00 : f32
    %47 = vector.broadcast %cst_20 : f32 to vector<8x256xf32>
    %48 = arith.addf %47, %46 : vector<8x256xf32>
    %49 = arith.mulf %11, %48 : vector<8x256xf32>
    %c0_21 = arith.constant 0 : index
    %c0_22 = arith.constant 0 : index
    %50 = vector.load %arg8[%c0_21, %c0_22] : memref<8x128xf32, #tpu.memory_space<vmem>>, vector<8x128xf32>
    %51 = arith.truncf %49 : vector<8x256xf32> to vector<8x256xbf16>
    %c0_23 = arith.constant 0 : index
    %c0_24 = arith.constant 0 : index
    %52 = vector.load %arg5[%c0_23, %c0_24] : memref<256x128xbf16, #tpu.memory_space<vmem>>, vector<256x128xbf16>
    %cst_25 = arith.constant dense<0.000000e+00> : vector<8x128xf32>
    %53 = tpu.matmul %51, %52, %cst_25 {dimension_numbers = #tpu.dot_dimension_numbers<[1], [0], [0], [1], [0, 0, 1, 1], [], []>} : vector<8x256xbf16>, vector<256x128xbf16>, vector<8x128xf32> -> vector<8x128xf32>
    %54 = arith.addf %50, %53 : vector<8x128xf32>
    %c0_26 = arith.constant 0 : index
    %c0_27 = arith.constant 0 : index
    %55 = vector.load %arg8[%c0_26, %c0_27] : memref<8x128xf32, #tpu.memory_space<vmem>>, vector<8x128xf32>
    tpu.vector_store %arg8[%c0_26, %c0_27], %54 {strides = array<i32>} : memref<8x128xf32, #tpu.memory_space<vmem>>, vector<8x128xf32>,
    %c0_i32_28 = arith.constant 0 : i32
    %56 = arith.cmpi eq, %arg1, %c0_i32_28 : i32
    %57 = arith.extui %56 : i1 to i32
    %c0_i32_29 = arith.constant 0 : i32
    %58 = arith.cmpi ne, %57, %c0_i32_29 : i32
    scf.if %58 {
      %c0_30 = arith.constant 0 : index
      %c0_31 = arith.constant 0 : index
      %59 = vector.load %arg8[%c0_30, %c0_31] : memref<8x128xf32, #tpu.memory_space<vmem>>, vector<8x128xf32>
      %c0_32 = arith.constant 0 : index
      %c0_33 = arith.constant 0 : index
      %60 = vector.load %arg6[%c0_32, %c0_33] : memref<1x128xf32, #tpu.memory_space<vmem>>, vector<1x128xf32>
      %61 = vector.broadcast %60 : vector<1x128xf32> to vector<8x128xf32>
      %62 = arith.addf %59, %61 : vector<8x128xf32>
      %c0_34 = arith.constant 0 : index
      %c0_35 = arith.constant 0 : index
      %63 = vector.load %arg7[%c0_34, %c0_35] : memref<8x128xf32, #tpu.memory_space<vmem>>, vector<8x128xf32>
      tpu.vector_store %arg7[%c0_34, %c0_35], %62 {strides = array<i32>} : memref<8x128xf32, #tpu.memory_space<vmem>>, vector<8x128xf32>,
    } else {
    }
    return
  }
  func.func @transform_0(%arg0: i32, %arg1: i32) -> (i32, i32) {
    %c0_i32 = arith.constant 0 : i32
    %c0_i32_0 = arith.constant 0 : i32
    return %arg0, %c0_i32 : i32, i32
  }
  func.func @transform_1(%arg0: i32, %arg1: i32) -> (i32, i32) {
    %c0_i32 = arith.constant 0 : i32
    %c0_i32_0 = arith.constant 0 : i32
    return %c0_i32, %arg1 : i32, i32
  }
  func.func @transform_2(%arg0: i32, %arg1: i32) -> (i32, i32) {
    %c0_i32 = arith.constant 0 : i32
    %c0_i32_0 = arith.constant 0 : i32
    return %c0_i32, %arg1 : i32, i32
  }
  func.func @transform_3(%arg0: i32, %arg1: i32) -> (i32, i32) {
    %c0_i32 = arith.constant 0 : i32
    %c0_i32_0 = arith.constant 0 : i32
    return %arg1, %c0_i32 : i32, i32
  }
  func.func @transform_4(%arg0: i32, %arg1: i32) -> (i32, i32) {
    %c0_i32 = arith.constant 0 : i32
    %c0_i32_0 = arith.constant 0 : i32
    %c0_i32_1 = arith.constant 0 : i32
    return %c0_i32, %c0_i32_0 : i32, i32
  }
  func.func @transform_5(%arg0: i32, %arg1: i32) -> (i32, i32) {
    %c0_i32 = arith.constant 0 : i32
    %c0_i32_0 = arith.constant 0 : i32
    return %arg0, %c0_i32 : i32, i32
  }
}

module attributes {stable_mosaic.version = 11 : i64} {
  func.func @_ffn_kernel(%arg0: i32, %arg1: i32, %arg2: memref<8x128xf32, #tpu.memory_space<vmem>>, %arg3: memref<128x256xbf16, #tpu.memory_space<vmem>>, %arg4: memref<1x256xf32, #tpu.memory_space<vmem>>, %arg5: memref<256x128xbf16, #tpu.memory_space<vmem>>, %arg6: memref<1x128xf32, #tpu.memory_space<vmem>>, %arg7: memref<8x128xf32, #tpu.memory_space<vmem>>, %arg8: memref<8x128xf32, #tpu.memory_space<vmem>>) attributes {dimension_semantics = [#tpu.dimension_semantics<parallel>, #tpu.dimension_semantics<arbitrary>], iteration_bounds = array<i64: 4, 1>, scalar_prefetch = 0 : i64, scratch_operands = 1 : i64, tpu.core_type = #tpu.core_type<tc>, window_params = [{transform_indices = @transform_0, window_bounds = array<i64: 8, 128>}, {transform_indices = @transform_1, window_bounds = array<i64: 128, 256>}, {transform_indices = @transform_2, window_bounds = array<i64: 1, 256>}, {transform_indices = @transform_3, window_bounds = array<i64: 256, 128>}, {pipeline_mode = #tpu.pipeline_mode<synchronous>, transform_indices = @transform_4, window_bounds = array<i64: 1, 128>}, {transform_indices = @transform_5, window_bounds = array<i64: 8, 128>}]} {
    %c0_i32 = arith.constant 0 : i32
    %0 = arith.cmpi eq, %arg1, %c0_i32 : i32
    %1 = arith.extui %0 : i1 to i32
    %c0_i32_0 = arith.constant 0 : i32
    %2 = arith.cmpi ne, %1, %c0_i32_0 : i32
    scf.if %2 {
      %cst_30 = arith.constant 0.000000e+00 : f32
      %59 = vector.broadcast %cst_30 : f32 to vector<8x128xf32>
      %c0_31 = arith.constant 0 : index
      %c0_32 = arith.constant 0 : index
      %60 = vector.load %arg8[%c0_31, %c0_32] : memref<8x128xf32, #tpu.memory_space<vmem>>, vector<8x128xf32>
      tpu.vector_store %arg8[%c0_31, %c0_32], %59 {strides = array<i32>} : memref<8x128xf32, #tpu.memory_space<vmem>>, vector<8x128xf32>,
    } else {
    }
    %c0 = arith.constant 0 : index
    %c0_1 = arith.constant 0 : index
    %3 = vector.load %arg2[%c0, %c0_1] : memref<8x128xf32, #tpu.memory_space<vmem>>, vector<8x128xf32>
    %4 = arith.truncf %3 : vector<8x128xf32> to vector<8x128xbf16>
    %c0_2 = arith.constant 0 : index
    %c0_3 = arith.constant 0 : index
    %5 = vector.load %arg3[%c0_2, %c0_3] : memref<128x256xbf16, #tpu.memory_space<vmem>>, vector<128x256xbf16>
    %cst = arith.constant dense<0.000000e+00> : vector<8x256xf32>
    %6 = tpu.matmul %4, %5, %cst {dimension_numbers = #tpu.dot_dimension_numbers<[1], [0], [0], [1], [0, 0, 1, 1], [], []>} : vector<8x128xbf16>, vector<128x256xbf16>, vector<8x256xf32> -> vector<8x256xf32>
    %c0_4 = arith.constant 0 : index
    %c0_5 = arith.constant 0 : index
    %7 = vector.load %arg4[%c0_4, %c0_5] : memref<1x256xf32, #tpu.memory_space<vmem>>, vector<1x256xf32>
    %8 = vector.broadcast %7 : vector<1x256xf32> to vector<8x256xf32>
    %9 = arith.addf %6, %8 : vector<8x256xf32>
    %cst_6 = arith.constant 5.000000e-01 : f32
    %10 = vector.broadcast %cst_6 : f32 to vector<8x256xf32>
    %11 = arith.mulf %10, %9 : vector<8x256xf32>
    %cst_7 = arith.constant 0.707106769 : f32
    %12 = vector.broadcast %cst_7 : f32 to vector<8x256xf32>
    %13 = arith.mulf %9, %12 : vector<8x256xf32>
    %14 = math.absf %13 : vector<8x256xf32>
    %cst_8 = arith.constant 0.327591091 : f32
    %15 = vector.broadcast %cst_8 : f32 to vector<8x256xf32>
    %16 = arith.mulf %15, %14 : vector<8x256xf32>
    %cst_9 = arith.constant 1.000000e+00 : f32
    %17 = vector.broadcast %cst_9 : f32 to vector<8x256xf32>
    %18 = arith.addf %17, %16 : vector<8x256xf32>
    %cst_10 = arith.constant 1.000000e+00 : f32
    %19 = vector.broadcast %cst_10 : f32 to vector<8x256xf32>
    %20 = arith.divf %19, %18 : vector<8x256xf32>
    %cst_11 = arith.constant 1.06140542 : f32
    %21 = vector.broadcast %cst_11 : f32 to vector<8x256xf32>
    %22 = arith.mulf %21, %20 : vector<8x256xf32>
    %cst_12 = arith.constant -1.45315206 : f32
    %23 = vector.broadcast %cst_12 : f32 to vector<8x256xf32>
    %24 = arith.addf %22, %23 : vector<8x256xf32>
    %25 = arith.mulf %24, %20 : vector<8x256xf32>
    %cst_13 = arith.constant 1.42141378 : f32
    %26 = vector.broadcast %cst_13 : f32 to vector<8x256xf32>
    %27 = arith.addf %25, %26 : vector<8x256xf32>
    %28 = arith.mulf %27, %20 : vector<8x256xf32>
    %cst_14 = arith.constant -0.284496725 : f32
    %29 = vector.broadcast %cst_14 : f32 to vector<8x256xf32>
    %30 = arith.addf %28, %29 : vector<8x256xf32>
    %31 = arith.mulf %30, %20 : vector<8x256xf32>
    %cst_15 = arith.constant 0.254829586 : f32
    %32 = vector.broadcast %cst_15 : f32 to vector<8x256xf32>
    %33 = arith.addf %31, %32 : vector<8x256xf32>
    %34 = arith.mulf %33, %20 : vector<8x256xf32>
    %35 = arith.mulf %14, %14 : vector<8x256xf32>
    %cst_16 = arith.constant 0.000000e+00 : f32
    %36 = vector.broadcast %cst_16 : f32 to vector<8x256xf32>
    %37 = arith.subf %36, %35 : vector<8x256xf32>
    %38 = math.exp %37 : vector<8x256xf32>
    %39 = arith.mulf %34, %38 : vector<8x256xf32>
    %cst_17 = arith.constant 1.000000e+00 : f32
    %40 = vector.broadcast %cst_17 : f32 to vector<8x256xf32>
    %41 = arith.subf %40, %39 : vector<8x256xf32>
    %cst_18 = arith.constant 0.000000e+00 : f32
    %42 = vector.broadcast %cst_18 : f32 to vector<8x256xf32>
    %43 = arith.cmpf oge, %13, %42 : vector<8x256xf32>
    %cst_19 = arith.constant 0.000000e+00 : f32
    %44 = vector.broadcast %cst_19 : f32 to vector<8x256xf32>
    %45 = arith.subf %44, %41 : vector<8x256xf32>
    %46 = arith.select %43, %41, %45 : vector<8x256xi1>, vector<8x256xf32>
    %cst_20 = arith.constant 1.000000e+00 : f32
    %47 = vector.broadcast %cst_20 : f32 to vector<8x256xf32>
    %48 = arith.addf %47, %46 : vector<8x256xf32>
    %49 = arith.mulf %11, %48 : vector<8x256xf32>
    %c0_21 = arith.constant 0 : index
    %c0_22 = arith.constant 0 : index
    %50 = vector.load %arg8[%c0_21, %c0_22] : memref<8x128xf32, #tpu.memory_space<vmem>>, vector<8x128xf32>
    %51 = arith.truncf %49 : vector<8x256xf32> to vector<8x256xbf16>
    %c0_23 = arith.constant 0 : index
    %c0_24 = arith.constant 0 : index
    %52 = vector.load %arg5[%c0_23, %c0_24] : memref<256x128xbf16, #tpu.memory_space<vmem>>, vector<256x128xbf16>
    %cst_25 = arith.constant dense<0.000000e+00> : vector<8x128xf32>
    %53 = tpu.matmul %51, %52, %cst_25 {dimension_numbers = #tpu.dot_dimension_numbers<[1], [0], [0], [1], [0, 0, 1, 1], [], []>} : vector<8x256xbf16>, vector<256x128xbf16>, vector<8x128xf32> -> vector<8x128xf32>
    %54 = arith.addf %50, %53 : vector<8x128xf32>
    %c0_26 = arith.constant 0 : index
    %c0_27 = arith.constant 0 : index
    %55 = vector.load %arg8[%c0_26, %c0_27] : memref<8x128xf32, #tpu.memory_space<vmem>>, vector<8x128xf32>
    tpu.vector_store %arg8[%c0_26, %c0_27], %54 {strides = array<i32>} : memref<8x128xf32, #tpu.memory_space<vmem>>, vector<8x128xf32>,
    %c0_i32_28 = arith.constant 0 : i32
    %56 = arith.cmpi eq, %arg1, %c0_i32_28 : i32
    %57 = arith.extui %56 : i1 to i32
    %c0_i32_29 = arith.constant 0 : i32
    %58 = arith.cmpi ne, %57, %c0_i32_29 : i32
    scf.if %58 {
      %c0_30 = arith.constant 0 : index
      %c0_31 = arith.constant 0 : index
      %59 = vector.load %arg8[%c0_30, %c0_31] : memref<8x128xf32, #tpu.memory_space<vmem>>, vector<8x128xf32>
      %c0_32 = arith.constant 0 : index
      %c0_33 = arith.constant 0 : index
      %60 = vector.load %arg6[%c0_32, %c0_33] : memref<1x128xf32, #tpu.memory_space<vmem>>, vector<1x128xf32>
      %61 = vector.broadcast %60 : vector<1x128xf32> to vector<8x128xf32>
      %62 = arith.addf %59, %61 : vector<8x128xf32>
      %c0_34 = arith.constant 0 : index
      %c0_35 = arith.constant 0 : index
      %63 = vector.load %arg7[%c0_34, %c0_35] : memref<8x128xf32, #tpu.memory_space<vmem>>, vector<8x128xf32>
      tpu.vector_store %arg7[%c0_34, %c0_35], %62 {strides = array<i32>} : memref<8x128xf32, #tpu.memory_space<vmem>>, vector<8x128xf32>,
    } else {
    }
    return
  }
  func.func @transform_0(%arg0: i32, %arg1: i32) -> (i32, i32) {
    %c0_i32 = arith.constant 0 : i32
    %c0_i32_0 = arith.constant 0 : i32
    return %arg0, %c0_i32 : i32, i32
  }
  func.func @transform_1(%arg0: i32, %arg1: i32) -> (i32, i32) {
    %c0_i32 = arith.constant 0 : i32
    %c0_i32_0 = arith.constant 0 : i32
    return %c0_i32, %arg1 : i32, i32
  }
  func.func @transform_2(%arg0: i32, %arg1: i32) -> (i32, i32) {
    %c0_i32 = arith.constant 0 : i32
    %c0_i32_0 = arith.constant 0 : i32
    return %c0_i32, %arg1 : i32, i32
  }
  func.func @transform_3(%arg0: i32, %arg1: i32) -> (i32, i32) {
    %c0_i32 = arith.constant 0 : i32
    %c0_i32_0 = arith.constant 0 : i32
    return %arg1, %c0_i32 : i32, i32
  }
  func.func @transform_4(%arg0: i32, %arg1: i32) -> (i32, i32) {
    %c0_i32 = arith.constant 0 : i32
    %c0_i32_0 = arith.constant 0 : i32
    %c0_i32_1 = arith.constant 0 : i32
    return %c0_i32, %c0_i32_0 : i32, i32
  }
  func.func @transform_5(%arg0: i32, %arg1: i32) -> (i32, i32) {
    %c0_i32 = arith.constant 0 : i32
    %c0_i32_0 = arith.constant 0 : i32
    return %arg0, %c0_i32 : i32, i32
  }
}

</mosaic_0001>

<llo_original>
// kernel: tpu_custom_call.1
$region0: #{tpu_custom_call.1}
  #allocation0 [shape = 'u32[]', space=smem, size = 0x4, offset = 0x4, fixed_abs, tag = 'smem constant byte address 0x4 - core index']
  #allocation1 [shape = 'u32[144,128]{1,0:T(1,128)}', space=vmem, size = 0x12000, scoped, tag = 'internal scratch']
  #allocation2 [shape = 'f32[8,128]{1,0:T(8,128)}', space=vmem, size = 0x1000, scoped, tag = 'scratch operand']
  %s0 = inlined_call_operand.hbm [shape: f32[32,128], index: 0, kind: input, shape index: {}]
  %s1 = inlined_call_operand.hbm [shape: bf16[128,256], index: 1, kind: input, shape index: {}]
  %s2 = inlined_call_operand.vmem [shape: f32[1,256], index: 2, kind: input, shape index: {}]
  %s3 = inlined_call_operand.hbm [shape: bf16[256,128], index: 3, kind: input, shape index: {}]
  %s4 = inlined_call_operand.vmem [shape: f32[1,128], index: 4, kind: input, shape index: {}]
  %s5 = inlined_call_operand.hbm [shape: f32[32,128], index: 5, kind: output, shape index: {}]
  %s6 = sld [smem:[#allocation0]]
  $region73: #{tpu_custom_call.1} parent=0
    _
  %s8 = ssub.s32 1, %s6
  %s9 = scalar_select 0, %s8, %s6
  $region1: #{tpu_custom_call.1} parent=0
    #allocation3 [shape = 'u8[8192]{0}', space=vmem, size = 0x2000, scoped, tag = 'input window, operand 0']
    #allocation4 [shape = 's32[2]{0}', space=sflag, size = 0x8, scoped, tag = 'scoped memory for tpu_custom_call.1']
    #allocation5 [shape = 's32[2]{0}', space=sflag, size = 0x8, scoped, tag = 'scoped memory for tpu_custom_call.1']
    #allocation6 [shape = 'u8[65536]{0}', space=vmem, size = 0x10000, scoped, tag = 'input window, operand 1, single buffered']
    #allocation7 [shape = 's32[1]{0}', space=sflag, size = 0x4, scoped, tag = 'scoped memory for tpu_custom_call.1']
    #allocation8 [shape = 'u8[65536]{0}', space=vmem, size = 0x10000, scoped, tag = 'input window, operand 3, single buffered']
    #allocation9 [shape = 'u8[8192]{0}', space=vmem, size = 0x2000, scoped, tag = 'output window, operand 0']
    %10 = vsyncpa [#allocation4], 0
    %s11 = scalar_lea.sflag [#allocation4], 1
    %12 = vsyncpa %s11, 0
    %13 = vsyncpa [#allocation7], 0
    %14 = vsyncpa [#allocation5], 0
    %s15 = scalar_lea.sflag [#allocation5], 1
    %16 = vsyncpa %s15, 0
    loop: start=0, step=1, limit=6
    $region2: #{tpu_custom_call.1} parent=1 // loop_pre_header
      _
    $region3: #{tpu_custom_call.1} parent=1 // loop_header
      %s18 = sphi 0, %s22
      %p19 = scmp.ge.s32.totalorder %s18, 6
      %s25 = sphi 0, %s37
      %s26 = sphi 0, %s33
      %s27 = sphi 0, %s25
      %s28 = sphi 0, %s26
      %s29 = sphi 0, %s27
      %s30 = sphi 0, %s28
      %s40 = sphi 0, %s42
      %s43 = sphi 0, %s40
      %s44 = sphi 0, %s43
      %s60 = sphi 0, %s44
      %s66 = sphi 0, %s68
      %s69 = sphi 0, %s66
      %s70 = sphi 0, %s69
      %s86 = sphi 0, %s70
      %s92 = sphi 0, %s94
      %s95 = sphi 0, %s92
      %s96 = sphi 0, %s95
      %s112 = sphi 0, %s96
      %s118 = sphi 0, %s120
      %s121 = sphi 0, %s118
      %s122 = sphi 0, %s121
      %s138 = sphi 0, %s122
      %s142 = sphi 0, %s142
      %s144 = sphi 0, %s142
      %s145 = sphi 0, %s144
      %s159 = sphi 0, %s145
      %s165 = sphi 0, %s167
      %s168 = sphi 0, %s165
      %s169 = sphi 0, %s168
      %s185 = sphi 0, %s169
    $region4: #{tpu_custom_call.1} parent=1 // loop_header_branch
      %21 = sbr.rel (%p19) target = $region8
    $region5: #{tpu_custom_call.1} parent=1 // loop_body
      %s23 = ssub.s32 %s18, 1
      %s24 = ssub.s32 %s18, 2
      %s31 = sadd.s32 1, %s26
      %p32 = scmp.ge.s32.totalorder %s31, 1
      %s33 = scalar_select %p32, 0, %s31
      %s34 = sadd.s32 1, %s25
      %s35 = scalar_select %p32, %s34, %s25
      %p36 = scmp.ge.s32.totalorder %s35, 4
      %s37 = scalar_select %p36, 0, %s35
      %s38 = ssub.s32 %s25, %s37
      %p39 = scmp.eq.s32.totalorder %s38, 0
      %s41 = sadd.s32 %s40, 1
      %s42 = scalar_select %p39, %s40, %s41
      %p45 = pneg %p39
      %p46 = scmp.eq.s32.totalorder %s18, 3
      %p47 = por %p45, %p46
      %p48 = scmp.ne.s32.totalorder %s40, %s43
      %p49 = scmp.eq.s32.totalorder %s18, 0
      %p50 = por %p48, %p49
      %p51 = scmp.ne.s32.totalorder %s40, %s43
      %p52 = scmp.eq.s32.totalorder %s23, 3
      %p53 = por %p51, %p52
      %p54 = scmp.ne.s32.totalorder %s43, %s44
      %p55 = scmp.eq.s32.totalorder %s23, 0
      %p56 = por %p54, %p55
      %p57 = scmp.ne.s32.totalorder %s43, %s44
      %p58 = scmp.eq.s32.totalorder %s24, 3
      %p59 = por %p57, %p58
      %p61 = scmp.ne.s32.totalorder %s44, %s60
      %p62 = scmp.eq.s32.totalorder %s24, 0
      %p63 = por %p61, %p62
      %s64 = ssub.s32 %s26, %s33
      %p65 = scmp.eq.s32.totalorder %s64, 0
      %s67 = sadd.s32 %s66, 1
      %s68 = scalar_select %p65, %s66, %s67
      %p71 = pneg %p65
      %p72 = scmp.eq.s32.totalorder %s18, 3
      %p73 = por %p71, %p72
      %p74 = scmp.ne.s32.totalorder %s66, %s69
      %p75 = scmp.eq.s32.totalorder %s18, 0
      %p76 = por %p74, %p75
      %p77 = scmp.ne.s32.totalorder %s66, %s69
      %p78 = scmp.eq.s32.totalorder %s23, 3
      %p79 = por %p77, %p78
      %p80 = scmp.ne.s32.totalorder %s69, %s70
      %p81 = scmp.eq.s32.totalorder %s23, 0
      %p82 = por %p80, %p81
      %p83 = scmp.ne.s32.totalorder %s69, %s70
      %p84 = scmp.eq.s32.totalorder %s24, 3
      %p85 = por %p83, %p84
      %p87 = scmp.ne.s32.totalorder %s70, %s86
      %p88 = scmp.eq.s32.totalorder %s24, 0
      %p89 = por %p87, %p88
      %s90 = ssub.s32 %s26, %s33
      %p91 = scmp.eq.s32.totalorder %s90, 0
      %s93 = sadd.s32 %s92, 1
      %s94 = scalar_select %p91, %s92, %s93
      %p97 = pneg %p91
      %p98 = scmp.eq.s32.totalorder %s18, 3
      %p99 = por %p97, %p98
      %p100 = scmp.ne.s32.totalorder %s92, %s95
      %p101 = scmp.eq.s32.totalorder %s18, 0
      %p102 = por %p100, %p101
      %p103 = scmp.ne.s32.totalorder %s92, %s95
      %p104 = scmp.eq.s32.totalorder %s23, 3
      %p105 = por %p103, %p104
      %p106 = scmp.ne.s32.totalorder %s95, %s96
      %p107 = scmp.eq.s32.totalorder %s23, 0
      %p108 = por %p106, %p107
      %p109 = scmp.ne.s32.totalorder %s95, %s96
      %p110 = scmp.eq.s32.totalorder %s24, 3
      %p111 = por %p109, %p110
      %p113 = scmp.ne.s32.totalorder %s96, %s112
      %p114 = scmp.eq.s32.totalorder %s24, 0
      %p115 = por %p113, %p114
      %s116 = ssub.s32 %s26, %s33
      %p117 = scmp.eq.s32.totalorder %s116, 0
      %s119 = sadd.s32 %s118, 1
      %s120 = scalar_select %p117, %s118, %s119
      %p123 = pneg %p117
      %p124 = scmp.eq.s32.totalorder %s18, 3
      %p125 = por %p123, %p124
      %p126 = scmp.ne.s32.totalorder %s118, %s121
      %p127 = scmp.eq.s32.totalorder %s18, 0
      %p128 = por %p126, %p127
      %p129 = scmp.ne.s32.totalorder %s118, %s121
      %p130 = scmp.eq.s32.totalorder %s23, 3
      %p131 = por %p129, %p130
      %p132 = scmp.ne.s32.totalorder %s121, %s122
      %p133 = scmp.eq.s32.totalorder %s23, 0
      %p134 = por %p132, %p133
      %p135 = scmp.ne.s32.totalorder %s121, %s122
      %p136 = scmp.eq.s32.totalorder %s24, 3
      %p137 = por %p135, %p136
      %p139 = scmp.ne.s32.totalorder %s122, %s138
      %p140 = scmp.eq.s32.totalorder %s24, 0
      %p141 = por %p139, %p140
      %s143 = sadd.s32 %s142, 1
      %p146 = scmp.eq.s32.totalorder %s18, 3
      %p147 = scmp.ne.s32.totalorder %s142, %s144
      %p148 = scmp.eq.s32.totalorder %s18, 0
      %p149 = por %p147, %p148
      %p150 = scmp.ne.s32.totalorder %s142, %s144
      %p151 = scmp.eq.s32.totalorder %s23, 3
      %p152 = por %p150, %p151
      %p153 = scmp.ne.s32.totalorder %s144, %s145
      %p154 = scmp.eq.s32.totalorder %s23, 0
      %p155 = por %p153, %p154
      %p156 = scmp.ne.s32.totalorder %s144, %s145
      %p157 = scmp.eq.s32.totalorder %s24, 3
      %p158 = por %p156, %p157
      %p160 = scmp.ne.s32.totalorder %s145, %s159
      %p161 = scmp.eq.s32.totalorder %s24, 0
      %p162 = por %p160, %p161
      %s163 = ssub.s32 %s25, %s37
      %p164 = scmp.eq.s32.totalorder %s163, 0
      %s166 = sadd.s32 %s165, 1
      %s167 = scalar_select %p164, %s165, %s166
      %p170 = pneg %p164
      %p171 = scmp.eq.s32.totalorder %s18, 3
      %p172 = por %p170, %p171
      %p173 = scmp.ne.s32.totalorder %s165, %s168
      %p174 = scmp.eq.s32.totalorder %s18, 0
      %p175 = por %p173, %p174
      %p176 = scmp.ne.s32.totalorder %s165, %s168
      %p177 = scmp.eq.s32.totalorder %s23, 3
      %p178 = por %p176, %p177
      %p179 = scmp.ne.s32.totalorder %s168, %s169
      %p180 = scmp.eq.s32.totalorder %s23, 0
      %p181 = por %p179, %p180
      %p182 = scmp.ne.s32.totalorder %s168, %s169
      %p183 = scmp.eq.s32.totalorder %s24, 3
      %p184 = por %p182, %p183
      %p186 = scmp.ne.s32.totalorder %s169, %s185
      %p187 = scmp.eq.s32.totalorder %s24, 0
      %p188 = por %p186, %p187
      %p189 = scmp.le.s32.totalorder 1, %s18
      %p190 = scmp.lt.s32.totalorder %s18, 5
      %p191 = pnand %p189, %p190
      %p192 = pneg %p191
      // Predicated region
      $region9: #{tpu_custom_call.1} parent=5 // pred_check
        _
      $region10: #{tpu_custom_call.1} parent=5 // pred_check_branch
        %194 = sbr.rel (%p191) target = $region12
      $region11: #{tpu_custom_call.1} parent=5 // pred_region
        %s195 = ssub.s32 %s18, 1
        // Predicated region
        $region13: #{tpu_custom_call.1} parent=11 // pred_check
          %p196 = pneg %p82
        $region14: #{tpu_custom_call.1} parent=11 // pred_check_branch
          %198 = sbr.rel (%p196) target = $region16
        $region15: #{tpu_custom_call.1} parent=11 // pred_region
          %s199 = smul.u32 2, %s28
          %s201 = ssub.s32 2048, 2048
          %202 = vsyncadd [#allocation7], %s201
          %s203 = smul.addr %s199, 64
          %s204 = scalar_lea.hbm %s1, %s203
          %s205 = sshll.u32 [#allocation6], 4
          %s206 = int_to_ptr.vmem [resolvable:$true] %s205
          %211 = dma.hbm_to_vmem [thread:$0]  %s204, 2048, %s206, [#allocation7], 128, 128, 8
        $region16: #{tpu_custom_call.1} parent=11 // pred_fallthru
          _
        // Predicated region
        $region17: #{tpu_custom_call.1} parent=11 // pred_check
          %p212 = pneg %p108
        $region18: #{tpu_custom_call.1} parent=11 // pred_check_branch
          %214 = sbr.rel (%p212) target = $region20
        $region19: #{tpu_custom_call.1} parent=11 // pred_region
          %s215 = smul.u32 2, %s28
          %p216 = scmp.lt.s32.totalorder %s215, 1
          %s217 = scalar_select %p216, %s215, 1
          %s218 = scalar_lea.vmem %s2, %s217
          %s219 = smul.u32 2, %s28
        $region20: #{tpu_custom_call.1} parent=11 // pred_fallthru
          _
        // Predicated region
        $region21: #{tpu_custom_call.1} parent=11 // pred_check
          %p220 = pneg %p134
        $region22: #{tpu_custom_call.1} parent=11 // pred_check_branch
          %222 = sbr.rel (%p220) target = $region24
        $region23: #{tpu_custom_call.1} parent=11 // pred_region
          %s223 = smul.u32 32, %s28
          %s225 = ssub.s32 2048, 2048
          %226 = vsyncadd [#allocation7], %s225
          %s227 = smul.addr %s223, 64
          %s228 = scalar_lea.hbm %s3, %s227
          %s229 = sshll.u32 [#allocation8], 4
          %s230 = int_to_ptr.vmem [resolvable:$true] %s229
          %235 = dma.hbm_to_vmem [thread:$0]  %s228, 2048, %s230, [#allocation7], 64, 64, 4
        $region24: #{tpu_custom_call.1} parent=11 // pred_fallthru
          _
        // Predicated region
        $region25: #{tpu_custom_call.1} parent=11 // pred_check
          %p236 = pneg %p155
        $region26: #{tpu_custom_call.1} parent=11 // pred_check_branch
          %238 = sbr.rel (%p236) target = $region28
        $region27: #{tpu_custom_call.1} parent=11 // pred_region
          _
        $region28: #{tpu_custom_call.1} parent=11 // pred_fallthru
          _
      $region12: #{tpu_custom_call.1} parent=5 // pred_fallthru
        _
      %p239 = scmp.lt.s32.totalorder %s18, 4
      // Predicated region
      $region29: #{tpu_custom_call.1} parent=5 // pred_check
        %p240 = pneg %p239
      $region30: #{tpu_custom_call.1} parent=5 // pred_check_branch
        %242 = sbr.rel (%p240) target = $region32
      $region31: #{tpu_custom_call.1} parent=5 // pred_region
        // Predicated region
        $region33: #{tpu_custom_call.1} parent=31 // pred_check
          %p243 = pneg %p50
        $region34: #{tpu_custom_call.1} parent=31 // pred_check_branch
          %245 = sbr.rel (%p243) target = $region36
        $region35: #{tpu_custom_call.1} parent=31 // pred_region
          %s246 = sand.u32 %s40, 1
          %s247 = scalar_lea.sflag [#allocation4], %s246
          %s248 = sand.u32 %s40, 1
          %s249 = smul.addr %s248, 8
          %s250 = scalar_lea.vmem [#allocation3], %s249
          %s252 = ssub.s32 128, 128
          %253 = vsyncadd %s247, %s252
          %s254 = smul.addr %s25, 128
          %s255 = scalar_lea.hbm %s0, %s254
          %s257 = sshll.u32 %s250, 4
          %s258 = int_to_ptr.vmem [resolvable:$true] %s257
          %260 = dma.hbm_to_vmem [thread:$0]  %s255, 128, %s258, %s247
        $region36: #{tpu_custom_call.1} parent=31 // pred_fallthru
          _
      $region32: #{tpu_custom_call.1} parent=5 // pred_fallthru
        _
      %p261 = scmp.le.s32.totalorder 1, %s18
      %p262 = scmp.lt.s32.totalorder %s18, 5
      %p263 = pnand %p261, %p262
      %p264 = pneg %p263
      // Predicated region
      $region37: #{tpu_custom_call.1} parent=5 // pred_check
        _
      $region38: #{tpu_custom_call.1} parent=5 // pred_check_branch
        %266 = sbr.rel (%p263) target = $region40
      $region39: #{tpu_custom_call.1} parent=5 // pred_region
        %s267 = ssub.s32 %s18, 1
        %s268 = sand.u32 %s43, 1
        %s269 = scalar_lea.sflag [#allocation4], %s268
        %s270 = sand.u32 %s43, 1
        %s271 = smul.addr %s270, 8
        %s272 = scalar_lea.vmem [#allocation3], %s271
        // Predicated region
        $region41: #{tpu_custom_call.1} parent=39 // pred_check
          %p273 = pneg %p56
        $region42: #{tpu_custom_call.1} parent=39 // pred_check_branch
          %275 = sbr.rel (%p273) target = $region44
        $region43: #{tpu_custom_call.1} parent=39 // pred_region
          %276 = dma.done %s269, 128
        $region44: #{tpu_custom_call.1} parent=39 // pred_fallthru
          _
        // Predicated region
        $region45: #{tpu_custom_call.1} parent=39 // pred_check
          %p277 = pneg %p82
        $region46: #{tpu_custom_call.1} parent=39 // pred_check_branch
          %279 = sbr.rel (%p277) target = $region48
        $region47: #{tpu_custom_call.1} parent=39 // pred_region
          %280 = dma.done [#allocation7], 2048
        $region48: #{tpu_custom_call.1} parent=39 // pred_fallthru
          _
        // Predicated region
        $region49: #{tpu_custom_call.1} parent=39 // pred_check
          %p281 = pneg %p134
        $region50: #{tpu_custom_call.1} parent=39 // pred_check_branch
          %283 = sbr.rel (%p281) target = $region52
        $region51: #{tpu_custom_call.1} parent=39 // pred_region
          %284 = dma.done [#allocation7], 2048
        $region52: #{tpu_custom_call.1} parent=39 // pred_fallthru
          _
        %s285 = sand.u32 %s43, 1
        %s286 = scalar_lea.sflag [#allocation4], %s285
        %s287 = sand.u32 %s43, 1
        %s288 = smul.addr %s287, 8
        %s289 = scalar_lea.vmem [#allocation3], %s288
        %p290 = pneg %p56
        %p291 = pneg %p53
        %p292 = pneg %p82
        %p293 = pneg %p79
        %s294 = smul.u32 2, %s28
        %p295 = scmp.lt.s32.totalorder %s294, 1
        %s296 = scalar_select %p295, %s294, 1
        %s297 = scalar_lea.vmem %s2, %s296
        %p298 = pneg %p108
        %p299 = pneg %p105
        %p300 = pneg %p134
        %p301 = pneg %p131
        %p302 = pneg %p155
        %p303 = pneg %p152
        %p304 = pneg %p181
        %p305 = pneg %p178
        %s306 = sand.u32 %s168, 1
        %s307 = scalar_lea.sflag [#allocation5], %s306
        %s308 = sand.u32 %s168, 1
        %s309 = smul.addr %s308, 8
        %s310 = scalar_lea.vmem [#allocation9], %s309
        %s311 = smul.u32 2, %s28
        %s312 = smul.u32 2, %s28
        %p313 = scmp.lt.s32.totalorder %s312, 1
        %s314 = scalar_select %p313, %s312, 1
        %s315 = scalar_lea.vmem %s2, %s314
        %s316 = smul.u32 2, %s28
        %s317 = smul.u32 32, %s28
        %p319 = scmp.eq.s32.totalorder %s28, 0
        // Predicated region
        $region53: #{tpu_custom_call.1} parent=39 // pred_check
          %p320 = pneg %p319
        $region54: #{tpu_custom_call.1} parent=39 // pred_check_branch
          %322 = sbr.rel (%p320) target = $region56
        $region55: #{tpu_custom_call.1} parent=39 // pred_region
          %323 = vst [vmem:[#allocation2] sm:$0xff] 0.0
        $region56: #{tpu_custom_call.1} parent=39 // pred_fallthru
          _
        %v324 = vld [vmem:[%s272] sm:$0xff]
        %v325 = vpack.c.bf16 %v324, %v324
        %v326 = vld [vmem:[#allocation6] sm:$0xff]
        %v327 = vld [vmem:[#allocation6 + $0x8] sm:$0xff]
        %v328 = vld [vmem:[#allocation6 + $0x10] sm:$0xff]
        %v329 = vld [vmem:[#allocation6 + $0x18] sm:$0xff]
        %v330 = vld [vmem:[#allocation6 + $0x20] sm:$0xff]
        %v331 = vld [vmem:[#allocation6 + $0x28] sm:$0xff]
        %v332 = vld [vmem:[#allocation6 + $0x30] sm:$0xff]
        %v333 = vld [vmem:[#allocation6 + $0x38] sm:$0xff]
        %v334 = vld [vmem:[#allocation6 + $0x40] sm:$0xff]
        %v335 = vld [vmem:[#allocation6 + $0x48] sm:$0xff]
        %v336 = vld [vmem:[#allocation6 + $0x50] sm:$0xff]
        %v337 = vld [vmem:[#allocation6 + $0x58] sm:$0xff]
        %v338 = vld [vmem:[#allocation6 + $0x60] sm:$0xff]
        %v339 = vld [vmem:[#allocation6 + $0x68] sm:$0xff]
        %v340 = vld [vmem:[#allocation6 + $0x70] sm:$0xff]
        %v341 = vld [vmem:[#allocation6 + $0x78] sm:$0xff]
        %v342 = vld [vmem:[%s315] sm:$0x3]
        %v344 = vlaneseq
        %v345 = vshrl.u32 %v344, 7
        %v346 = vsub.s32 0, %v345
        %v347 = vrot.slane %v342, %v346
        %v348 = vlaneseq
        %v349 = vshrl.u32 %v348, 7
        %v350 = vsub.s32 1, %v349
        %v351 = vrot.slane %v342, %v350
        %v370 = vunpack.c.l.b16 %v326
        %v371 = vunpack.c.h.b16 %v326
        %v372 = vunpack.c.l.b16 %v327
        %v373 = vunpack.c.h.b16 %v327
        %v374 = vunpack.c.l.b16 %v328
        %v375 = vunpack.c.h.b16 %v328
        %v376 = vunpack.c.l.b16 %v329
        %v377 = vunpack.c.h.b16 %v329
        %v378 = vunpack.c.l.b16 %v330
        %v379 = vunpack.c.h.b16 %v330
        %v380 = vunpack.c.l.b16 %v331
        %v381 = vunpack.c.h.b16 %v331
        %v382 = vunpack.c.l.b16 %v332
        %v383 = vunpack.c.h.b16 %v332
        %v384 = vunpack.c.l.b16 %v333
        %v385 = vunpack.c.h.b16 %v333
        %v386 = vunpack.c.l.b16 %v334
        %v387 = vunpack.c.h.b16 %v334
        %v388 = vunpack.c.l.b16 %v335
        %v389 = vunpack.c.h.b16 %v335
        %v390 = vunpack.c.l.b16 %v336
        %v391 = vunpack.c.h.b16 %v336
        %v392 = vunpack.c.l.b16 %v337
        %v393 = vunpack.c.h.b16 %v337
        %v394 = vunpack.c.l.b16 %v338
        %v395 = vunpack.c.h.b16 %v338
        %v396 = vunpack.c.l.b16 %v339
        %v397 = vunpack.c.h.b16 %v339
        %v398 = vunpack.c.l.b16 %v340
        %v399 = vunpack.c.h.b16 %v340
        %v400 = vunpack.c.l.b16 %v341
        %v401 = vunpack.c.h.b16 %v341
        %v402 = vpack.c.b16 %v372, %v370
        %v403 = vpack.c.b16 %v373, %v371
        %v404 = vpack.c.b16 %v376, %v374
        %v405 = vpack.c.b16 %v377, %v375
        %v406 = vpack.c.b16 %v380, %v378
        %v407 = vpack.c.b16 %v381, %v379
        %v408 = vpack.c.b16 %v384, %v382
        %v409 = vpack.c.b16 %v385, %v383
        %v410 = vpack.c.b16 %v388, %v386
        %v411 = vpack.c.b16 %v389, %v387
        %v412 = vpack.c.b16 %v392, %v390
        %v413 = vpack.c.b16 %v393, %v391
        %v414 = vpack.c.b16 %v396, %v394
        %v415 = vpack.c.b16 %v397, %v395
        %v416 = vpack.c.b16 %v400, %v398
        %v417 = vpack.c.b16 %v401, %v399
        %434 = vmatprep.subr.bf16.mxu0 %v403
        %435 = vmatpush1.bf16.msra.mxu0 %v402
        %436 = vmatprep.subr.bf16.mxu0 %v405
        %437 = vmatpush1.bf16.msra.mxu0 %v404
        %438 = vmatprep.subr.bf16.mxu0 %v407
        %439 = vmatpush1.bf16.msra.mxu0 %v406
        %440 = vmatprep.subr.bf16.mxu0 %v409
        %441 = vmatpush1.bf16.msra.mxu0 %v408
        %442 = vmatprep.subr.bf16.mxu0 %v411
        %443 = vmatpush1.bf16.msra.mxu0 %v410
        %444 = vmatprep.subr.bf16.mxu0 %v413
        %445 = vmatpush1.bf16.msra.mxu0 %v412
        %446 = vmatprep.subr.bf16.mxu0 %v415
        %447 = vmatpush1.bf16.msra.mxu0 %v414
        %448 = vmatprep.subr.bf16.mxu0 %v417
        %449 = vmatpush1.bf16.msra.mxu0 %v416
        %450 = vmatprep.subr.bf16.mxu0 0
        %451 = vmatpush1.bf16.msra.mxu0 0
        %452 = vmatprep.subr.bf16.mxu0 0
        %453 = vmatpush1.bf16.msra.mxu0 0
        %454 = vmatprep.subr.bf16.mxu0 0
        %455 = vmatpush1.bf16.msra.mxu0 0
        %456 = vmatprep.subr.bf16.mxu0 0
        %457 = vmatpush1.bf16.msra.mxu0 0
        %458 = vmatprep.subr.bf16.mxu0 0
        %459 = vmatpush1.bf16.msra.mxu0 0
        %460 = vmatprep.subr.bf16.mxu0 0
        %461 = vmatpush1.bf16.msra.mxu0 0
        %462 = vmatprep.subr.bf16.mxu0 0
        %463 = vmatpush1.bf16.msra.mxu0 0
        %464 = vmatprep.subr.bf16.mxu0 0
        %465 = vmatpush1.bf16.msra.mxu0 0
        %466 = vmatprep.mubr.bf16.mxu0 0
        %467 = vmatmul.mubr.bf16.gmra.mrb[0].mxu0 %v325
        %v468 = vpop.f32.mrb[0].mxu0
        %v469 = vadd.f32 %v347, %v468
        %v470 = vpop.f32.mrb[0].mxu0
        %v471 = vadd.f32 %v351, %v470
        %v472 = vpop.f32.mrb[0].mxu0
        %v473 = vpop.f32.mrb[0].mxu0
        %474 = vdwg.mxu0
        %v475 = vmul.f32 %v469, 0.5
        %v476 = vmul.f32 %v471, 0.5
        %v477 = vmul.f32 %v469, 0.70710677
        %v478 = vmul.f32 %v471, 0.70710677
        %v479 = vand.u32 2147483647, %v477
        %v480 = vand.u32 2147483647, %v478
        %v481 = vmul.f32 %v479, 0.3275911
        %v482 = vmul.f32 %v480, 0.3275911
        %v483 = vadd.f32 %v481, 1.0
        %v484 = vadd.f32 %v482, 1.0
        %v485 = vrcp.pop %v483
        %v486 = vmul.f32 1.0, %v485
        %v487 = vrcp.pop %v484
        %v488 = vmul.f32 1.0, %v487
        %v489 = vmul.f32 %v486, 1.0614054
        %v490 = vmul.f32 %v488, 1.0614054
        %v491 = vadd.f32 %v489, -1.4531521
        %v492 = vadd.f32 %v490, -1.4531521
        %v493 = vmul.f32 %v491, %v486
        %v494 = vmul.f32 %v492, %v488
        %v495 = vadd.f32 %v493, 1.4214138
        %v496 = vadd.f32 %v494, 1.4214138
        %v497 = vmul.f32 %v495, %v486
        %v498 = vmul.f32 %v496, %v488
        %v499 = vadd.f32 %v497, -0.28449672
        %v500 = vadd.f32 %v498, -0.28449672
        %v501 = vmul.f32 %v499, %v486
        %v502 = vmul.f32 %v500, %v488
        %v503 = vadd.f32 %v501, 0.2548296
        %v504 = vadd.f32 %v502, 0.2548296
        %v505 = vmul.f32 %v503, %v486
        %v506 = vmul.f32 %v504, %v488
        %v507 = vmul.f32 %v479, %v479
        %v508 = vmul.f32 %v480, %v480
        %v509 = vsub.f32 0.0, %v507
        %v510 = vsub.f32 0.0, %v508
        %v511 = vmul.f32 %v509, 1.442695
        %v512 = vpow.pop %v511
        %v513 = vmul.f32 %v510, 1.442695
        %v514 = vpow.pop %v513
        %v515 = vmul.f32 %v505, %v512
        %v516 = vmul.f32 %v506, %v514
        %v517 = vsub.f32 1.0, %v515
        %v518 = vsub.f32 1.0, %v516
        %vm519 = vcmp.ge.f32.partialorder %v477, 0.0
        %vm520 = vcmp.ge.f32.partialorder %v478, 0.0
        %v521 = vsub.f32 0.0, %v517
        %v522 = vsub.f32 0.0, %v518
        %v523 = vsel %vm519, %v517, %v521
        %v524 = vsel %vm520, %v518, %v522
        %v525 = vadd.f32 %v523, 1.0
        %v526 = vadd.f32 %v524, 1.0
        %v527 = vmul.f32 %v475, %v525
        %v528 = vmul.f32 %v476, %v526
        %v529 = vld [vmem:[#allocation2] sm:$0xff]
        %v530 = vpack.c.bf16 %v527, %v527
        %v531 = vpack.c.bf16 %v528, %v528
        %v532 = vld [vmem:[#allocation8] sm:$0xf]
        %v533 = vld [vmem:[#allocation8 + $0x4] sm:$0xf]
        %v534 = vld [vmem:[#allocation8 + $0x8] sm:$0xf]
        %v535 = vld [vmem:[#allocation8 + $0xc] sm:$0xf]
        %v536 = vld [vmem:[#allocation8 + $0x10] sm:$0xf]
        %v537 = vld [vmem:[#allocation8 + $0x14] sm:$0xf]
        %v538 = vld [vmem:[#allocation8 + $0x18] sm:$0xf]
        %v539 = vld [vmem:[#allocation8 + $0x1c] sm:$0xf]
        %v540 = vld [vmem:[#allocation8 + $0x20] sm:$0xf]
        %v541 = vld [vmem:[#allocation8 + $0x24] sm:$0xf]
        %v542 = vld [vmem:[#allocation8 + $0x28] sm:$0xf]
        %v543 = vld [vmem:[#allocation8 + $0x2c] sm:$0xf]
        %v544 = vld [vmem:[#allocation8 + $0x30] sm:$0xf]
        %v545 = vld [vmem:[#allocation8 + $0x34] sm:$0xf]
        %v546 = vld [vmem:[#allocation8 + $0x38] sm:$0xf]
        %v547 = vld [vmem:[#allocation8 + $0x3c] sm:$0xf]
        %v548 = vld [vmem:[#allocation8 + $0x40] sm:$0xf]
        %v549 = vld [vmem:[#allocation8 + $0x44] sm:$0xf]
        %v550 = vld [vmem:[#allocation8 + $0x48] sm:$0xf]
        %v551 = vld [vmem:[#allocation8 + $0x4c] sm:$0xf]
        %v552 = vld [vmem:[#allocation8 + $0x50] sm:$0xf]
        %v553 = vld [vmem:[#allocation8 + $0x54] sm:$0xf]
        %v554 = vld [vmem:[#allocation8 + $0x58] sm:$0xf]
        %v555 = vld [vmem:[#allocation8 + $0x5c] sm:$0xf]
        %v556 = vld [vmem:[#allocation8 + $0x60] sm:$0xf]
        %v557 = vld [vmem:[#allocation8 + $0x64] sm:$0xf]
        %v558 = vld [vmem:[#allocation8 + $0x68] sm:$0xf]
        %v559 = vld [vmem:[#allocation8 + $0x6c] sm:$0xf]
        %v560 = vld [vmem:[#allocation8 + $0x70] sm:$0xf]
        %v561 = vld [vmem:[#allocation8 + $0x74] sm:$0xf]
        %v562 = vld [vmem:[#allocation8 + $0x78] sm:$0xf]
        %v563 = vld [vmem:[#allocation8 + $0x7c] sm:$0xf]
        %v596 = vunpack.c.l.b16 %v532
        %v597 = vunpack.c.l.b16 %v533
        %v598 = vunpack.c.l.b16 %v534
        %v599 = vunpack.c.l.b16 %v535
        %v600 = vunpack.c.l.b16 %v536
        %v601 = vunpack.c.l.b16 %v537
        %v602 = vunpack.c.l.b16 %v538
        %v603 = vunpack.c.l.b16 %v539
        %v604 = vunpack.c.l.b16 %v540
        %v605 = vunpack.c.l.b16 %v541
        %v606 = vunpack.c.l.b16 %v542
        %v607 = vunpack.c.l.b16 %v543
        %v608 = vunpack.c.l.b16 %v544
        %v609 = vunpack.c.l.b16 %v545
        %v610 = vunpack.c.l.b16 %v546
        %v611 = vunpack.c.l.b16 %v547
        %v612 = vunpack.c.l.b16 %v548
        %v613 = vunpack.c.l.b16 %v549
        %v614 = vunpack.c.l.b16 %v550
        %v615 = vunpack.c.l.b16 %v551
        %v616 = vunpack.c.l.b16 %v552
        %v617 = vunpack.c.l.b16 %v553
        %v618 = vunpack.c.l.b16 %v554
        %v619 = vunpack.c.l.b16 %v555
        %v620 = vunpack.c.l.b16 %v556
        %v621 = vunpack.c.l.b16 %v557
        %v622 = vunpack.c.l.b16 %v558
        %v623 = vunpack.c.l.b16 %v559
        %v624 = vunpack.c.l.b16 %v560
        %v625 = vunpack.c.l.b16 %v561
        %v626 = vunpack.c.l.b16 %v562
        %v627 = vunpack.c.l.b16 %v563
        %v628 = vpack.c.b16 %v597, %v596
        %v629 = vpack.c.b16 %v599, %v598
        %v630 = vpack.c.b16 %v601, %v600
        %v631 = vpack.c.b16 %v603, %v602
        %v632 = vpack.c.b16 %v605, %v604
        %v633 = vpack.c.b16 %v607, %v606
        %v634 = vpack.c.b16 %v609, %v608
        %v635 = vpack.c.b16 %v611, %v610
        %v636 = vpack.c.b16 %v613, %v612
        %v637 = vpack.c.b16 %v615, %v614
        %v638 = vpack.c.b16 %v617, %v616
        %v639 = vpack.c.b16 %v619, %v618
        %v640 = vpack.c.b16 %v621, %v620
        %v641 = vpack.c.b16 %v623, %v622
        %v642 = vpack.c.b16 %v625, %v624
        %v643 = vpack.c.b16 %v627, %v626
        %660 = vmatprep.subr.bf16.mxu0 0
        %661 = vmatpush1.bf16.msra.mxu0 %v628
        %662 = vmatprep.subr.bf16.mxu0 0
        %663 = vmatpush1.bf16.msra.mxu0 %v629
        %664 = vmatprep.subr.bf16.mxu0 0
        %665 = vmatpush1.bf16.msra.mxu0 %v630
        %666 = vmatprep.subr.bf16.mxu0 0
        %667 = vmatpush1.bf16.msra.mxu0 %v631
        %668 = vmatprep.subr.bf16.mxu0 0
        %669 = vmatpush1.bf16.msra.mxu0 %v632
        %670 = vmatprep.subr.bf16.mxu0 0
        %671 = vmatpush1.bf16.msra.mxu0 %v633
        %672 = vmatprep.subr.bf16.mxu0 0
        %673 = vmatpush1.bf16.msra.mxu0 %v634
        %674 = vmatprep.subr.bf16.mxu0 0
        %675 = vmatpush1.bf16.msra.mxu0 %v635
        %676 = vmatprep.subr.bf16.mxu0 0
        %677 = vmatpush1.bf16.msra.mxu0 %v636
        %678 = vmatprep.subr.bf16.mxu0 0
        %679 = vmatpush1.bf16.msra.mxu0 %v637
        %680 = vmatprep.subr.bf16.mxu0 0
        %681 = vmatpush1.bf16.msra.mxu0 %v638
        %682 = vmatprep.subr.bf16.mxu0 0
        %683 = vmatpush1.bf16.msra.mxu0 %v639
        %684 = vmatprep.subr.bf16.mxu0 0
        %685 = vmatpush1.bf16.msra.mxu0 %v640
        %686 = vmatprep.subr.bf16.mxu0 0
        %687 = vmatpush1.bf16.msra.mxu0 %v641
        %688 = vmatprep.subr.bf16.mxu0 0
        %689 = vmatpush1.bf16.msra.mxu0 %v642
        %690 = vmatprep.subr.bf16.mxu0 0
        %691 = vmatpush1.bf16.msra.mxu0 %v643
        %692 = vmatprep.mubr.bf16.mxu0 %v531
        %693 = vmatmul.mubr.bf16.gmra.mrb[0].mxu0 %v530
        %v694 = vpop.f32.mrb[0].mxu0
        %v695 = vadd.f32 0.0, %v694
        %v696 = vpop.f32.mrb[0].mxu0
        %v697 = vpop.f32.mrb[0].mxu0
        %v698 = vpop.f32.mrb[0].mxu0
        %699 = vdwg.mxu0
        %v700 = vadd.f32 %v529, %v695
        %701 = vst [vmem:[#allocation2] sm:$0xff] %v700
        // Predicated region
        $region57: #{tpu_custom_call.1} parent=39 // pred_check
          %p702 = pneg %p319
        $region58: #{tpu_custom_call.1} parent=39 // pred_check_branch
          %704 = sbr.rel (%p702) target = $region60
        $region59: #{tpu_custom_call.1} parent=39 // pred_region
          %v705 = vld [vmem:[#allocation2] sm:$0xff]
          %v706 = vld [vmem:[%s4] sm:$0x1]
          %v708 = vlaneseq
          %v709 = vshrl.u32 %v708, 7
          %v710 = vsub.s32 0, %v709
          %v711 = vrot.slane %v706, %v710
          %v713 = vadd.f32 %v705, %v711
          %714 = vst [vmem:[%s310] sm:$0xff] %v713
        $region60: #{tpu_custom_call.1} parent=39 // pred_fallthru
          _
        %s715 = sand.u32 %s168, 1
        %s716 = scalar_lea.sflag [#allocation5], %s715
        %s717 = sand.u32 %s168, 1
        %s718 = smul.addr %s717, 8
        %s719 = scalar_lea.vmem [#allocation9], %s718
        // Predicated region
        $region61: #{tpu_custom_call.1} parent=39 // pred_check
          %p720 = pneg %p178
        $region62: #{tpu_custom_call.1} parent=39 // pred_check_branch
          %722 = sbr.rel (%p720) target = $region64
        $region63: #{tpu_custom_call.1} parent=39 // pred_region
          %s724 = ssub.s32 128, 128
          %725 = vsyncadd %s716, %s724
          %s726 = smul.addr %s27, 128
          %s727 = scalar_lea.hbm %s5, %s726
          %s729 = sshll.u32 %s719, 4
          %s730 = int_to_ptr.vmem [resolvable:$true] %s729
          %732 = dma.vmem_to_hbm [thread:$0]  %s730, 128, %s727, %s716
        $region64: #{tpu_custom_call.1} parent=39 // pred_fallthru
          _
      $region40: #{tpu_custom_call.1} parent=5 // pred_fallthru
        _
      %p733 = scmp.le.s32.totalorder 2, %s18
      // Predicated region
      $region65: #{tpu_custom_call.1} parent=5 // pred_check
        %p734 = pneg %p733
      $region66: #{tpu_custom_call.1} parent=5 // pred_check_branch
        %736 = sbr.rel (%p734) target = $region68
      $region67: #{tpu_custom_call.1} parent=5 // pred_region
        %s737 = ssub.s32 %s18, 2
        // Predicated region
        $region69: #{tpu_custom_call.1} parent=67 // pred_check
          %p738 = pneg %p184
        $region70: #{tpu_custom_call.1} parent=67 // pred_check_branch
          %740 = sbr.rel (%p738) target = $region72
        $region71: #{tpu_custom_call.1} parent=67 // pred_region
          %s741 = sand.u32 %s169, 1
          %s742 = scalar_lea.sflag [#allocation5], %s741
          %s743 = sand.u32 %s169, 1
          %s744 = smul.addr %s743, 8
          %s745 = scalar_lea.vmem [#allocation9], %s744
          %746 = dma.done %s742, 128
        $region72: #{tpu_custom_call.1} parent=67 // pred_fallthru
          _
      $region68: #{tpu_custom_call.1} parent=5 // pred_fallthru
        _
    $region6: #{tpu_custom_call.1} parent=1 // loop_footer
      %s22 = sadd.s32 1, %s18
    $region7: #{tpu_custom_call.1} parent=1 // loop_footer_branch
      %17 = sbr.rel target = $region3
    $region8: #{tpu_custom_call.1} parent=1 // loop_exit
      _
    %747 = vsyncpa [#allocation4], 1
    %s748 = scalar_lea.sflag [#allocation4], 1
    %749 = vsyncpa %s748, 1
    %750 = vsyncpa [#allocation7], 1
    %751 = vsyncpa [#allocation5], 1
    %s752 = scalar_lea.sflag [#allocation5], 1
    %753 = vsyncpa %s752, 1

// kernel: tpu_custom_call.1
$region0: #{tpu_custom_call.1}
  #allocation0 [shape = 'u32[]', space=smem, size = 0x4, offset = 0x4, fixed_abs, tag = 'smem constant byte address 0x4 - core index']
  #allocation1 [shape = 'u32[144,128]{1,0:T(1,128)}', space=vmem, size = 0x12000, scoped, tag = 'internal scratch']
  #allocation2 [shape = 'f32[8,128]{1,0:T(8,128)}', space=vmem, size = 0x1000, scoped, tag = 'scratch operand']
  %s0 = inlined_call_operand.hbm [shape: f32[32,128], index: 0, kind: input, shape index: {}]
  %s1 = inlined_call_operand.hbm [shape: bf16[128,256], index: 1, kind: input, shape index: {}]
  %s2 = inlined_call_operand.vmem [shape: f32[1,256], index: 2, kind: input, shape index: {}]
  %s3 = inlined_call_operand.hbm [shape: bf16[256,128], index: 3, kind: input, shape index: {}]
  %s4 = inlined_call_operand.vmem [shape: f32[1,128], index: 4, kind: input, shape index: {}]
  %s5 = inlined_call_operand.hbm [shape: f32[32,128], index: 5, kind: output, shape index: {}]
  %s6 = sld [smem:[#allocation0]]
  $region73: #{tpu_custom_call.1} parent=0
    _
  %s8 = ssub.s32 1, %s6
  %s9 = scalar_select 0, %s8, %s6
  $region1: #{tpu_custom_call.1} parent=0
    #allocation3 [shape = 'u8[8192]{0}', space=vmem, size = 0x2000, scoped, tag = 'input window, operand 0']
    #allocation4 [shape = 's32[2]{0}', space=sflag, size = 0x8, scoped, tag = 'scoped memory for tpu_custom_call.1']
    #allocation5 [shape = 's32[2]{0}', space=sflag, size = 0x8, scoped, tag = 'scoped memory for tpu_custom_call.1']
    #allocation6 [shape = 'u8[65536]{0}', space=vmem, size = 0x10000, scoped, tag = 'input window, operand 1, single buffered']
    #allocation7 [shape = 's32[1]{0}', space=sflag, size = 0x4, scoped, tag = 'scoped memory for tpu_custom_call.1']
    #allocation8 [shape = 'u8[65536]{0}', space=vmem, size = 0x10000, scoped, tag = 'input window, operand 3, single buffered']
    #allocation9 [shape = 'u8[8192]{0}', space=vmem, size = 0x2000, scoped, tag = 'output window, operand 0']
    %10 = vsyncpa [#allocation4], 0
    %s11 = scalar_lea.sflag [#allocation4], 1
    %12 = vsyncpa %s11, 0
    %13 = vsyncpa [#allocation7], 0
    %14 = vsyncpa [#allocation5], 0
    %s15 = scalar_lea.sflag [#allocation5], 1
    %16 = vsyncpa %s15, 0
    loop: start=0, step=1, limit=6
    $region2: #{tpu_custom_call.1} parent=1 // loop_pre_header
      _
    $region3: #{tpu_custom_call.1} parent=1 // loop_header
      %s18 = sphi 0, %s22
      %p19 = scmp.ge.s32.totalorder %s18, 6
      %s25 = sphi 0, %s37
      %s26 = sphi 0, %s33
      %s27 = sphi 0, %s25
      %s28 = sphi 0, %s26
      %s29 = sphi 0, %s27
      %s30 = sphi 0, %s28
      %s40 = sphi 0, %s42
      %s43 = sphi 0, %s40
      %s44 = sphi 0, %s43
      %s60 = sphi 0, %s44
      %s66 = sphi 0, %s68
      %s69 = sphi 0, %s66
      %s70 = sphi 0, %s69
      %s86 = sphi 0, %s70
      %s92 = sphi 0, %s94
      %s95 = sphi 0, %s92
      %s96 = sphi 0, %s95
      %s112 = sphi 0, %s96
      %s118 = sphi 0, %s120
      %s121 = sphi 0, %s118
      %s122 = sphi 0, %s121
      %s138 = sphi 0, %s122
      %s142 = sphi 0, %s142
      %s144 = sphi 0, %s142
      %s145 = sphi 0, %s144
      %s159 = sphi 0, %s145
      %s165 = sphi 0, %s167
      %s168 = sphi 0, %s165
      %s169 = sphi 0, %s168
      %s185 = sphi 0, %s169
    $region4: #{tpu_custom_call.1} parent=1 // loop_header_branch
      %21 = sbr.rel (%p19) target = $region8
    $region5: #{tpu_custom_call.1} parent=1 // loop_body
      %s23 = ssub.s32 %s18, 1
      %s24 = ssub.s32 %s18, 2
      %s31 = sadd.s32 1, %s26
      %p32 = scmp.ge.s32.totalorder %s31, 1
      %s33 = scalar_select %p32, 0, %s31
      %s34 = sadd.s32 1, %s25
      %s35 = scalar_select %p32, %s34, %s25
      %p36 = scmp.ge.s32.totalorder %s35, 4
      %s37 = scalar_select %p36, 0, %s35
      %s38 = ssub.s32 %s25, %s37
      %p39 = scmp.eq.s32.totalorder %s38, 0
      %s41 = sadd.s32 %s40, 1
      %s42 = scalar_select %p39, %s40, %s41
      %p45 = pneg %p39
      %p46 = scmp.eq.s32.totalorder %s18, 3
      %p47 = por %p45, %p46
      %p48 = scmp.ne.s32.totalorder %s40, %s43
      %p49 = scmp.eq.s32.totalorder %s18, 0
      %p50 = por %p48, %p49
      %p51 = scmp.ne.s32.totalorder %s40, %s43
      %p52 = scmp.eq.s32.totalorder %s23, 3
      %p53 = por %p51, %p52
      %p54 = scmp.ne.s32.totalorder %s43, %s44
      %p55 = scmp.eq.s32.totalorder %s23, 0
      %p56 = por %p54, %p55
      %p57 = scmp.ne.s32.totalorder %s43, %s44
      %p58 = scmp.eq.s32.totalorder %s24, 3
      %p59 = por %p57, %p58
      %p61 = scmp.ne.s32.totalorder %s44, %s60
      %p62 = scmp.eq.s32.totalorder %s24, 0
      %p63 = por %p61, %p62
      %s64 = ssub.s32 %s26, %s33
      %p65 = scmp.eq.s32.totalorder %s64, 0
      %s67 = sadd.s32 %s66, 1
      %s68 = scalar_select %p65, %s66, %s67
      %p71 = pneg %p65
      %p72 = scmp.eq.s32.totalorder %s18, 3
      %p73 = por %p71, %p72
      %p74 = scmp.ne.s32.totalorder %s66, %s69
      %p75 = scmp.eq.s32.totalorder %s18, 0
      %p76 = por %p74, %p75
      %p77 = scmp.ne.s32.totalorder %s66, %s69
      %p78 = scmp.eq.s32.totalorder %s23, 3
      %p79 = por %p77, %p78
      %p80 = scmp.ne.s32.totalorder %s69, %s70
      %p81 = scmp.eq.s32.totalorder %s23, 0
      %p82 = por %p80, %p81
      %p83 = scmp.ne.s32.totalorder %s69, %s70
      %p84 = scmp.eq.s32.totalorder %s24, 3
      %p85 = por %p83, %p84
      %p87 = scmp.ne.s32.totalorder %s70, %s86
      %p88 = scmp.eq.s32.totalorder %s24, 0
      %p89 = por %p87, %p88
      %s90 = ssub.s32 %s26, %s33
      %p91 = scmp.eq.s32.totalorder %s90, 0
      %s93 = sadd.s32 %s92, 1
      %s94 = scalar_select %p91, %s92, %s93
      %p97 = pneg %p91
      %p98 = scmp.eq.s32.totalorder %s18, 3
      %p99 = por %p97, %p98
      %p100 = scmp.ne.s32.totalorder %s92, %s95
      %p101 = scmp.eq.s32.totalorder %s18, 0
      %p102 = por %p100, %p101
      %p103 = scmp.ne.s32.totalorder %s92, %s95
      %p104 = scmp.eq.s32.totalorder %s23, 3
      %p105 = por %p103, %p104
      %p106 = scmp.ne.s32.totalorder %s95, %s96
      %p107 = scmp.eq.s32.totalorder %s23, 0
      %p108 = por %p106, %p107
      %p109 = scmp.ne.s32.totalorder %s95, %s96
      %p110 = scmp.eq.s32.totalorder %s24, 3
      %p111 = por %p109, %p110
      %p113 = scmp.ne.s32.totalorder %s96, %s112
      %p114 = scmp.eq.s32.totalorder %s24, 0
      %p115 = por %p113, %p114
      %s116 = ssub.s32 %s26, %s33
      %p117 = scmp.eq.s32.totalorder %s116, 0
      %s119 = sadd.s32 %s118, 1
      %s120 = scalar_select %p117, %s118, %s119
      %p123 = pneg %p117
      %p124 = scmp.eq.s32.totalorder %s18, 3
      %p125 = por %p123, %p124
      %p126 = scmp.ne.s32.totalorder %s118, %s121
      %p127 = scmp.eq.s32.totalorder %s18, 0
      %p128 = por %p126, %p127
      %p129 = scmp.ne.s32.totalorder %s118, %s121
      %p130 = scmp.eq.s32.totalorder %s23, 3
      %p131 = por %p129, %p130
      %p132 = scmp.ne.s32.totalorder %s121, %s122
      %p133 = scmp.eq.s32.totalorder %s23, 0
      %p134 = por %p132, %p133
      %p135 = scmp.ne.s32.totalorder %s121, %s122
      %p136 = scmp.eq.s32.totalorder %s24, 3
      %p137 = por %p135, %p136
      %p139 = scmp.ne.s32.totalorder %s122, %s138
      %p140 = scmp.eq.s32.totalorder %s24, 0
      %p141 = por %p139, %p140
      %s143 = sadd.s32 %s142, 1
      %p146 = scmp.eq.s32.totalorder %s18, 3
      %p147 = scmp.ne.s32.totalorder %s142, %s144
      %p148 = scmp.eq.s32.totalorder %s18, 0
      %p149 = por %p147, %p148
      %p150 = scmp.ne.s32.totalorder %s142, %s144
      %p151 = scmp.eq.s32.totalorder %s23, 3
      %p152 = por %p150, %p151
      %p153 = scmp.ne.s32.totalorder %s144, %s145
      %p154 = scmp.eq.s32.totalorder %s23, 0
      %p155 = por %p153, %p154
      %p156 = scmp.ne.s32.totalorder %s144, %s145
      %p157 = scmp.eq.s32.totalorder %s24, 3
      %p158 = por %p156, %p157
      %p160 = scmp.ne.s32.totalorder %s145, %s159
      %p161 = scmp.eq.s32.totalorder %s24, 0
      %p162 = por %p160, %p161
      %s163 = ssub.s32 %s25, %s37
      %p164 = scmp.eq.s32.totalorder %s163, 0
      %s166 = sadd.s32 %s165, 1
      %s167 = scalar_select %p164, %s165, %s166
      %p170 = pneg %p164
      %p171 = scmp.eq.s32.totalorder %s18, 3
      %p172 = por %p170, %p171
      %p173 = scmp.ne.s32.totalorder %s165, %s168
      %p174 = scmp.eq.s32.totalorder %s18, 0
      %p175 = por %p173, %p174
      %p176 = scmp.ne.s32.totalorder %s165, %s168
      %p177 = scmp.eq.s32.totalorder %s23, 3
      %p178 = por %p176, %p177
      %p179 = scmp.ne.s32.totalorder %s168, %s169
      %p180 = scmp.eq.s32.totalorder %s23, 0
      %p181 = por %p179, %p180
      %p182 = scmp.ne.s32.totalorder %s168, %s169
      %p183 = scmp.eq.s32.totalorder %s24, 3
      %p184 = por %p182, %p183
      %p186 = scmp.ne.s32.totalorder %s169, %s185
      %p187 = scmp.eq.s32.totalorder %s24, 0
      %p188 = por %p186, %p187
      %p189 = scmp.le.s32.totalorder 1, %s18
      %p190 = scmp.lt.s32.totalorder %s18, 5
      %p191 = pnand %p189, %p190
      %p192 = pneg %p191
      // Predicated region
      $region9: #{tpu_custom_call.1} parent=5 // pred_check
        _
      $region10: #{tpu_custom_call.1} parent=5 // pred_check_branch
        %194 = sbr.rel (%p191) target = $region12
      $region11: #{tpu_custom_call.1} parent=5 // pred_region
        %s195 = ssub.s32 %s18, 1
        // Predicated region
        $region13: #{tpu_custom_call.1} parent=11 // pred_check
          %p196 = pneg %p82
        $region14: #{tpu_custom_call.1} parent=11 // pred_check_branch
          %198 = sbr.rel (%p196) target = $region16
        $region15: #{tpu_custom_call.1} parent=11 // pred_region
          %s199 = smul.u32 2, %s28
          %s201 = ssub.s32 2048, 2048
          %202 = vsyncadd [#allocation7], %s201
          %s203 = smul.addr %s199, 64
          %s204 = scalar_lea.hbm %s1, %s203
          %s205 = sshll.u32 [#allocation6], 4
          %s206 = int_to_ptr.vmem [resolvable:$true] %s205
          %211 = dma.hbm_to_vmem [thread:$0]  %s204, 2048, %s206, [#allocation7], 128, 128, 8
        $region16: #{tpu_custom_call.1} parent=11 // pred_fallthru
          _
        // Predicated region
        $region17: #{tpu_custom_call.1} parent=11 // pred_check
          %p212 = pneg %p108
        $region18: #{tpu_custom_call.1} parent=11 // pred_check_branch
          %214 = sbr.rel (%p212) target = $region20
        $region19: #{tpu_custom_call.1} parent=11 // pred_region
          %s215 = smul.u32 2, %s28
          %p216 = scmp.lt.s32.totalorder %s215, 1
          %s217 = scalar_select %p216, %s215, 1
          %s218 = scalar_lea.vmem %s2, %s217
          %s219 = smul.u32 2, %s28
        $region20: #{tpu_custom_call.1} parent=11 // pred_fallthru
          _
        // Predicated region
        $region21: #{tpu_custom_call.1} parent=11 // pred_check
          %p220 = pneg %p134
        $region22: #{tpu_custom_call.1} parent=11 // pred_check_branch
          %222 = sbr.rel (%p220) target = $region24
        $region23: #{tpu_custom_call.1} parent=11 // pred_region
          %s223 = smul.u32 32, %s28
          %s225 = ssub.s32 2048, 2048
          %226 = vsyncadd [#allocation7], %s225
          %s227 = smul.addr %s223, 64
          %s228 = scalar_lea.hbm %s3, %s227
          %s229 = sshll.u32 [#allocation8], 4
          %s230 = int_to_ptr.vmem [resolvable:$true] %s229
          %235 = dma.hbm_to_vmem [thread:$0]  %s228, 2048, %s230, [#allocation7], 64, 64, 4
        $region24: #{tpu_custom_call.1} parent=11 // pred_fallthru
          _
        // Predicated region
        $region25: #{tpu_custom_call.1} parent=11 // pred_check
          %p236 = pneg %p155
        $region26: #{tpu_custom_call.1} parent=11 // pred_check_branch
          %238 = sbr.rel (%p236) target = $region28
        $region27: #{tpu_custom_call.1} parent=11 // pred_region
          _
        $region28: #{tpu_custom_call.1} parent=11 // pred_fallthru
          _
      $region12: #{tpu_custom_call.1} parent=5 // pred_fallthru
        _
      %p239 = scmp.lt.s32.totalorder %s18, 4
      // Predicated region
      $region29: #{tpu_custom_call.1} parent=5 // pred_check
        %p240 = pneg %p239
      $region30: #{tpu_custom_call.1} parent=5 // pred_check_branch
        %242 = sbr.rel (%p240) target = $region32
      $region31: #{tpu_custom_call.1} parent=5 // pred_region
        // Predicated region
        $region33: #{tpu_custom_call.1} parent=31 // pred_check
          %p243 = pneg %p50
        $region34: #{tpu_custom_call.1} parent=31 // pred_check_branch
          %245 = sbr.rel (%p243) target = $region36
        $region35: #{tpu_custom_call.1} parent=31 // pred_region
          %s246 = sand.u32 %s40, 1
          %s247 = scalar_lea.sflag [#allocation4], %s246
          %s248 = sand.u32 %s40, 1
          %s249 = smul.addr %s248, 8
          %s250 = scalar_lea.vmem [#allocation3], %s249
          %s252 = ssub.s32 128, 128
          %253 = vsyncadd %s247, %s252
          %s254 = smul.addr %s25, 128
          %s255 = scalar_lea.hbm %s0, %s254
          %s257 = sshll.u32 %s250, 4
          %s258 = int_to_ptr.vmem [resolvable:$true] %s257
          %260 = dma.hbm_to_vmem [thread:$0]  %s255, 128, %s258, %s247
        $region36: #{tpu_custom_call.1} parent=31 // pred_fallthru
          _
      $region32: #{tpu_custom_call.1} parent=5 // pred_fallthru
        _
      %p261 = scmp.le.s32.totalorder 1, %s18
      %p262 = scmp.lt.s32.totalorder %s18, 5
      %p263 = pnand %p261, %p262
      %p264 = pneg %p263
      // Predicated region
      $region37: #{tpu_custom_call.1} parent=5 // pred_check
        _
      $region38: #{tpu_custom_call.1} parent=5 // pred_check_branch
        %266 = sbr.rel (%p263) target = $region40
      $region39: #{tpu_custom_call.1} parent=5 // pred_region
        %s267 = ssub.s32 %s18, 1
        %s268 = sand.u32 %s43, 1
        %s269 = scalar_lea.sflag [#allocation4], %s268
        %s270 = sand.u32 %s43, 1
        %s271 = smul.addr %s270, 8
        %s272 = scalar_lea.vmem [#allocation3], %s271
        // Predicated region
        $region41: #{tpu_custom_call.1} parent=39 // pred_check
          %p273 = pneg %p56
        $region42: #{tpu_custom_call.1} parent=39 // pred_check_branch
          %275 = sbr.rel (%p273) target = $region44
        $region43: #{tpu_custom_call.1} parent=39 // pred_region
          %276 = dma.done %s269, 128
        $region44: #{tpu_custom_call.1} parent=39 // pred_fallthru
          _
        // Predicated region
        $region45: #{tpu_custom_call.1} parent=39 // pred_check
          %p277 = pneg %p82
        $region46: #{tpu_custom_call.1} parent=39 // pred_check_branch
          %279 = sbr.rel (%p277) target = $region48
        $region47: #{tpu_custom_call.1} parent=39 // pred_region
          %280 = dma.done [#allocation7], 2048
        $region48: #{tpu_custom_call.1} parent=39 // pred_fallthru
          _
        // Predicated region
        $region49: #{tpu_custom_call.1} parent=39 // pred_check
          %p281 = pneg %p134
        $region50: #{tpu_custom_call.1} parent=39 // pred_check_branch
          %283 = sbr.rel (%p281) target = $region52
        $region51: #{tpu_custom_call.1} parent=39 // pred_region
          %284 = dma.done [#allocation7], 2048
        $region52: #{tpu_custom_call.1} parent=39 // pred_fallthru
          _
        %s285 = sand.u32 %s43, 1
        %s286 = scalar_lea.sflag [#allocation4], %s285
        %s287 = sand.u32 %s43, 1
        %s288 = smul.addr %s287, 8
        %s289 = scalar_lea.vmem [#allocation3], %s288
        %p290 = pneg %p56
        %p291 = pneg %p53
        %p292 = pneg %p82
        %p293 = pneg %p79
        %s294 = smul.u32 2, %s28
        %p295 = scmp.lt.s32.totalorder %s294, 1
        %s296 = scalar_select %p295, %s294, 1
        %s297 = scalar_lea.vmem %s2, %s296
        %p298 = pneg %p108
        %p299 = pneg %p105
        %p300 = pneg %p134
        %p301 = pneg %p131
        %p302 = pneg %p155
        %p303 = pneg %p152
        %p304 = pneg %p181
        %p305 = pneg %p178
        %s306 = sand.u32 %s168, 1
        %s307 = scalar_lea.sflag [#allocation5], %s306
        %s308 = sand.u32 %s168, 1
        %s309 = smul.addr %s308, 8
        %s310 = scalar_lea.vmem [#allocation9], %s309
        %s311 = smul.u32 2, %s28
        %s312 = smul.u32 2, %s28
        %p313 = scmp.lt.s32.totalorder %s312, 1
        %s314 = scalar_select %p313, %s312, 1
        %s315 = scalar_lea.vmem %s2, %s314
        %s316 = smul.u32 2, %s28
        %s317 = smul.u32 32, %s28
        %p319 = scmp.eq.s32.totalorder %s28, 0
        // Predicated region
        $region53: #{tpu_custom_call.1} parent=39 // pred_check
          %p320 = pneg %p319
        $region54: #{tpu_custom_call.1} parent=39 // pred_check_branch
          %322 = sbr.rel (%p320) target = $region56
        $region55: #{tpu_custom_call.1} parent=39 // pred_region
          %323 = vst [vmem:[#allocation2] sm:$0xff] 0.0
        $region56: #{tpu_custom_call.1} parent=39 // pred_fallthru
          _
        %v324 = vld [vmem:[%s272] sm:$0xff]
        %v325 = vpack.c.bf16 %v324, %v324
        %v326 = vld [vmem:[#allocation6] sm:$0xff]
        %v327 = vld [vmem:[#allocation6 + $0x8] sm:$0xff]
        %v328 = vld [vmem:[#allocation6 + $0x10] sm:$0xff]
        %v329 = vld [vmem:[#allocation6 + $0x18] sm:$0xff]
        %v330 = vld [vmem:[#allocation6 + $0x20] sm:$0xff]
        %v331 = vld [vmem:[#allocation6 + $0x28] sm:$0xff]
        %v332 = vld [vmem:[#allocation6 + $0x30] sm:$0xff]
        %v333 = vld [vmem:[#allocation6 + $0x38] sm:$0xff]
        %v334 = vld [vmem:[#allocation6 + $0x40] sm:$0xff]
        %v335 = vld [vmem:[#allocation6 + $0x48] sm:$0xff]
        %v336 = vld [vmem:[#allocation6 + $0x50] sm:$0xff]
        %v337 = vld [vmem:[#allocation6 + $0x58] sm:$0xff]
        %v338 = vld [vmem:[#allocation6 + $0x60] sm:$0xff]
        %v339 = vld [vmem:[#allocation6 + $0x68] sm:$0xff]
        %v340 = vld [vmem:[#allocation6 + $0x70] sm:$0xff]
        %v341 = vld [vmem:[#allocation6 + $0x78] sm:$0xff]
        %v342 = vld [vmem:[%s315] sm:$0x3]
        %v344 = vlaneseq
        %v345 = vshrl.u32 %v344, 7
        %v346 = vsub.s32 0, %v345
        %v347 = vrot.slane %v342, %v346
        %v348 = vlaneseq
        %v349 = vshrl.u32 %v348, 7
        %v350 = vsub.s32 1, %v349
        %v351 = vrot.slane %v342, %v350
        %v370 = vunpack.c.l.b16 %v326
        %v371 = vunpack.c.h.b16 %v326
        %v372 = vunpack.c.l.b16 %v327
        %v373 = vunpack.c.h.b16 %v327
        %v374 = vunpack.c.l.b16 %v328
        %v375 = vunpack.c.h.b16 %v328
        %v376 = vunpack.c.l.b16 %v329
        %v377 = vunpack.c.h.b16 %v329
        %v378 = vunpack.c.l.b16 %v330
        %v379 = vunpack.c.h.b16 %v330
        %v380 = vunpack.c.l.b16 %v331
        %v381 = vunpack.c.h.b16 %v331
        %v382 = vunpack.c.l.b16 %v332
        %v383 = vunpack.c.h.b16 %v332
        %v384 = vunpack.c.l.b16 %v333
        %v385 = vunpack.c.h.b16 %v333
        %v386 = vunpack.c.l.b16 %v334
        %v387 = vunpack.c.h.b16 %v334
        %v388 = vunpack.c.l.b16 %v335
        %v389 = vunpack.c.h.b16 %v335
        %v390 = vunpack.c.l.b16 %v336
        %v391 = vunpack.c.h.b16 %v336
        %v392 = vunpack.c.l.b16 %v337
        %v393 = vunpack.c.h.b16 %v337
        %v394 = vunpack.c.l.b16 %v338
        %v395 = vunpack.c.h.b16 %v338
        %v396 = vunpack.c.l.b16 %v339
        %v397 = vunpack.c.h.b16 %v339
        %v398 = vunpack.c.l.b16 %v340
        %v399 = vunpack.c.h.b16 %v340
        %v400 = vunpack.c.l.b16 %v341
        %v401 = vunpack.c.h.b16 %v341
        %v402 = vpack.c.b16 %v372, %v370
        %v403 = vpack.c.b16 %v373, %v371
        %v404 = vpack.c.b16 %v376, %v374
        %v405 = vpack.c.b16 %v377, %v375
        %v406 = vpack.c.b16 %v380, %v378
        %v407 = vpack.c.b16 %v381, %v379
        %v408 = vpack.c.b16 %v384, %v382
        %v409 = vpack.c.b16 %v385, %v383
        %v410 = vpack.c.b16 %v388, %v386
        %v411 = vpack.c.b16 %v389, %v387
        %v412 = vpack.c.b16 %v392, %v390
        %v413 = vpack.c.b16 %v393, %v391
        %v414 = vpack.c.b16 %v396, %v394
        %v415 = vpack.c.b16 %v397, %v395
        %v416 = vpack.c.b16 %v400, %v398
        %v417 = vpack.c.b16 %v401, %v399
        %434 = vmatprep.subr.bf16.mxu0 %v403
        %435 = vmatpush1.bf16.msra.mxu0 %v402
        %436 = vmatprep.subr.bf16.mxu0 %v405
        %437 = vmatpush1.bf16.msra.mxu0 %v404
        %438 = vmatprep.subr.bf16.mxu0 %v407
        %439 = vmatpush1.bf16.msra.mxu0 %v406
        %440 = vmatprep.subr.bf16.mxu0 %v409
        %441 = vmatpush1.bf16.msra.mxu0 %v408
        %442 = vmatprep.subr.bf16.mxu0 %v411
        %443 = vmatpush1.bf16.msra.mxu0 %v410
        %444 = vmatprep.subr.bf16.mxu0 %v413
        %445 = vmatpush1.bf16.msra.mxu0 %v412
        %446 = vmatprep.subr.bf16.mxu0 %v415
        %447 = vmatpush1.bf16.msra.mxu0 %v414
        %448 = vmatprep.subr.bf16.mxu0 %v417
        %449 = vmatpush1.bf16.msra.mxu0 %v416
        %450 = vmatprep.subr.bf16.mxu0 0
        %451 = vmatpush1.bf16.msra.mxu0 0
        %452 = vmatprep.subr.bf16.mxu0 0
        %453 = vmatpush1.bf16.msra.mxu0 0
        %454 = vmatprep.subr.bf16.mxu0 0
        %455 = vmatpush1.bf16.msra.mxu0 0
        %456 = vmatprep.subr.bf16.mxu0 0
        %457 = vmatpush1.bf16.msra.mxu0 0
        %458 = vmatprep.subr.bf16.mxu0 0
        %459 = vmatpush1.bf16.msra.mxu0 0
        %460 = vmatprep.subr.bf16.mxu0 0
        %461 = vmatpush1.bf16.msra.mxu0 0
        %462 = vmatprep.subr.bf16.mxu0 0
        %463 = vmatpush1.bf16.msra.mxu0 0
        %464 = vmatprep.subr.bf16.mxu0 0
        %465 = vmatpush1.bf16.msra.mxu0 0
        %466 = vmatprep.mubr.bf16.mxu0 0
        %467 = vmatmul.mubr.bf16.gmra.mrb[0].mxu0 %v325
        %v468 = vpop.f32.mrb[0].mxu0
        %v469 = vadd.f32 %v347, %v468
        %v470 = vpop.f32.mrb[0].mxu0
        %v471 = vadd.f32 %v351, %v470
        %v472 = vpop.f32.mrb[0].mxu0
        %v473 = vpop.f32.mrb[0].mxu0
        %474 = vdwg.mxu0
        %v475 = vmul.f32 %v469, 0.5
        %v476 = vmul.f32 %v471, 0.5
        %v477 = vmul.f32 %v469, 0.70710677
        %v478 = vmul.f32 %v471, 0.70710677
        %v479 = vand.u32 2147483647, %v477
        %v480 = vand.u32 2147483647, %v478
        %v481 = vmul.f32 %v479, 0.3275911
        %v482 = vmul.f32 %v480, 0.3275911
        %v483 = vadd.f32 %v481, 1.0
        %v484 = vadd.f32 %v482, 1.0
        %v485 = vrcp.pop %v483
        %v486 = vmul.f32 1.0, %v485
        %v487 = vrcp.pop %v484
        %v488 = vmul.f32 1.0, %v487
        %v489 = vmul.f32 %v486, 1.0614054
        %v490 = vmul.f32 %v488, 1.0614054
        %v491 = vadd.f32 %v489, -1.4531521
        %v492 = vadd.f32 %v490, -1.4531521
        %v493 = vmul.f32 %v491, %v486
        %v494 = vmul.f32 %v492, %v488
        %v495 = vadd.f32 %v493, 1.4214138
        %v496 = vadd.f32 %v494, 1.4214138
        %v497 = vmul.f32 %v495, %v486
        %v498 = vmul.f32 %v496, %v488
        %v499 = vadd.f32 %v497, -0.28449672
        %v500 = vadd.f32 %v498, -0.28449672
        %v501 = vmul.f32 %v499, %v486
        %v502 = vmul.f32 %v500, %v488
        %v503 = vadd.f32 %v501, 0.2548296
        %v504 = vadd.f32 %v502, 0.2548296
        %v505 = vmul.f32 %v503, %v486
        %v506 = vmul.f32 %v504, %v488
        %v507 = vmul.f32 %v479, %v479
        %v508 = vmul.f32 %v480, %v480
        %v509 = vsub.f32 0.0, %v507
        %v510 = vsub.f32 0.0, %v508
        %v511 = vmul.f32 %v509, 1.442695
        %v512 = vpow.pop %v511
        %v513 = vmul.f32 %v510, 1.442695
        %v514 = vpow.pop %v513
        %v515 = vmul.f32 %v505, %v512
        %v516 = vmul.f32 %v506, %v514
        %v517 = vsub.f32 1.0, %v515
        %v518 = vsub.f32 1.0, %v516
        %vm519 = vcmp.ge.f32.partialorder %v477, 0.0
        %vm520 = vcmp.ge.f32.partialorder %v478, 0.0
        %v521 = vsub.f32 0.0, %v517
        %v522 = vsub.f32 0.0, %v518
        %v523 = vsel %vm519, %v517, %v521
        %v524 = vsel %vm520, %v518, %v522
        %v525 = vadd.f32 %v523, 1.0
        %v526 = vadd.f32 %v524, 1.0
        %v527 = vmul.f32 %v475, %v525
        %v528 = vmul.f32 %v476, %v526
        %v529 = vld [vmem:[#allocation2] sm:$0xff]
        %v530 = vpack.c.bf16 %v527, %v527
        %v531 = vpack.c.bf16 %v528, %v528
        %v532 = vld [vmem:[#allocation8] sm:$0xf]
        %v533 = vld [vmem:[#allocation8 + $0x4] sm:$0xf]
        %v534 = vld [vmem:[#allocation8 + $0x8] sm:$0xf]
        %v535 = vld [vmem:[#allocation8 + $0xc] sm:$0xf]
        %v536 = vld [vmem:[#allocation8 + $0x10] sm:$0xf]
        %v537 = vld [vmem:[#allocation8 + $0x14] sm:$0xf]
        %v538 = vld [vmem:[#allocation8 + $0x18] sm:$0xf]
        %v539 = vld [vmem:[#allocation8 + $0x1c] sm:$0xf]
        %v540 = vld [vmem:[#allocation8 + $0x20] sm:$0xf]
        %v541 = vld [vmem:[#allocation8 + $0x24] sm:$0xf]
        %v542 = vld [vmem:[#allocation8 + $0x28] sm:$0xf]
        %v543 = vld [vmem:[#allocation8 + $0x2c] sm:$0xf]
        %v544 = vld [vmem:[#allocation8 + $0x30] sm:$0xf]
        %v545 = vld [vmem:[#allocation8 + $0x34] sm:$0xf]
        %v546 = vld [vmem:[#allocation8 + $0x38] sm:$0xf]
        %v547 = vld [vmem:[#allocation8 + $0x3c] sm:$0xf]
        %v548 = vld [vmem:[#allocation8 + $0x40] sm:$0xf]
        %v549 = vld [vmem:[#allocation8 + $0x44] sm:$0xf]
        %v550 = vld [vmem:[#allocation8 + $0x48] sm:$0xf]
        %v551 = vld [vmem:[#allocation8 + $0x4c] sm:$0xf]
        %v552 = vld [vmem:[#allocation8 + $0x50] sm:$0xf]
        %v553 = vld [vmem:[#allocation8 + $0x54] sm:$0xf]
        %v554 = vld [vmem:[#allocation8 + $0x58] sm:$0xf]
        %v555 = vld [vmem:[#allocation8 + $0x5c] sm:$0xf]
        %v556 = vld [vmem:[#allocation8 + $0x60] sm:$0xf]
        %v557 = vld [vmem:[#allocation8 + $0x64] sm:$0xf]
        %v558 = vld [vmem:[#allocation8 + $0x68] sm:$0xf]
        %v559 = vld [vmem:[#allocation8 + $0x6c] sm:$0xf]
        %v560 = vld [vmem:[#allocation8 + $0x70] sm:$0xf]
        %v561 = vld [vmem:[#allocation8 + $0x74] sm:$0xf]
        %v562 = vld [vmem:[#allocation8 + $0x78] sm:$0xf]
        %v563 = vld [vmem:[#allocation8 + $0x7c] sm:$0xf]
        %v596 = vunpack.c.l.b16 %v532
        %v597 = vunpack.c.l.b16 %v533
        %v598 = vunpack.c.l.b16 %v534
        %v599 = vunpack.c.l.b16 %v535
        %v600 = vunpack.c.l.b16 %v536
        %v601 = vunpack.c.l.b16 %v537
        %v602 = vunpack.c.l.b16 %v538
        %v603 = vunpack.c.l.b16 %v539
        %v604 = vunpack.c.l.b16 %v540
        %v605 = vunpack.c.l.b16 %v541
        %v606 = vunpack.c.l.b16 %v542
        %v607 = vunpack.c.l.b16 %v543
        %v608 = vunpack.c.l.b16 %v544
        %v609 = vunpack.c.l.b16 %v545
        %v610 = vunpack.c.l.b16 %v546
        %v611 = vunpack.c.l.b16 %v547
        %v612 = vunpack.c.l.b16 %v548
        %v613 = vunpack.c.l.b16 %v549
        %v614 = vunpack.c.l.b16 %v550
        %v615 = vunpack.c.l.b16 %v551
        %v616 = vunpack.c.l.b16 %v552
        %v617 = vunpack.c.l.b16 %v553
        %v618 = vunpack.c.l.b16 %v554
        %v619 = vunpack.c.l.b16 %v555
        %v620 = vunpack.c.l.b16 %v556
        %v621 = vunpack.c.l.b16 %v557
        %v622 = vunpack.c.l.b16 %v558
        %v623 = vunpack.c.l.b16 %v559
        %v624 = vunpack.c.l.b16 %v560
        %v625 = vunpack.c.l.b16 %v561
        %v626 = vunpack.c.l.b16 %v562
        %v627 = vunpack.c.l.b16 %v563
        %v628 = vpack.c.b16 %v597, %v596
        %v629 = vpack.c.b16 %v599, %v598
        %v630 = vpack.c.b16 %v601, %v600
        %v631 = vpack.c.b16 %v603, %v602
        %v632 = vpack.c.b16 %v605, %v604
        %v633 = vpack.c.b16 %v607, %v606
        %v634 = vpack.c.b16 %v609, %v608
        %v635 = vpack.c.b16 %v611, %v610
        %v636 = vpack.c.b16 %v613, %v612
        %v637 = vpack.c.b16 %v615, %v614
        %v638 = vpack.c.b16 %v617, %v616
        %v639 = vpack.c.b16 %v619, %v618
        %v640 = vpack.c.b16 %v621, %v620
        %v641 = vpack.c.b16 %v623, %v622
        %v642 = vpack.c.b16 %v625, %v624
        %v643 = vpack.c.b16 %v627, %v626
        %660 = vmatprep.subr.bf16.mxu0 0
        %661 = vmatpush1.bf16.msra.mxu0 %v628
        %662 = vmatprep.subr.bf16.mxu0 0
        %663 = vmatpush1.bf16.msra.mxu0 %v629
        %664 = vmatprep.subr.bf16.mxu0 0
        %665 = vmatpush1.bf16.msra.mxu0 %v630
        %666 = vmatprep.subr.bf16.mxu0 0
        %667 = vmatpush1.bf16.msra.mxu0 %v631
        %668 = vmatprep.subr.bf16.mxu0 0
        %669 = vmatpush1.bf16.msra.mxu0 %v632
        %670 = vmatprep.subr.bf16.mxu0 0
        %671 = vmatpush1.bf16.msra.mxu0 %v633
        %672 = vmatprep.subr.bf16.mxu0 0
        %673 = vmatpush1.bf16.msra.mxu0 %v634
        %674 = vmatprep.subr.bf16.mxu0 0
        %675 = vmatpush1.bf16.msra.mxu0 %v635
        %676 = vmatprep.subr.bf16.mxu0 0
        %677 = vmatpush1.bf16.msra.mxu0 %v636
        %678 = vmatprep.subr.bf16.mxu0 0
        %679 = vmatpush1.bf16.msra.mxu0 %v637
        %680 = vmatprep.subr.bf16.mxu0 0
        %681 = vmatpush1.bf16.msra.mxu0 %v638
        %682 = vmatprep.subr.bf16.mxu0 0
        %683 = vmatpush1.bf16.msra.mxu0 %v639
        %684 = vmatprep.subr.bf16.mxu0 0
        %685 = vmatpush1.bf16.msra.mxu0 %v640
        %686 = vmatprep.subr.bf16.mxu0 0
        %687 = vmatpush1.bf16.msra.mxu0 %v641
        %688 = vmatprep.subr.bf16.mxu0 0
        %689 = vmatpush1.bf16.msra.mxu0 %v642
        %690 = vmatprep.subr.bf16.mxu0 0
        %691 = vmatpush1.bf16.msra.mxu0 %v643
        %692 = vmatprep.mubr.bf16.mxu0 %v531
        %693 = vmatmul.mubr.bf16.gmra.mrb[0].mxu0 %v530
        %v694 = vpop.f32.mrb[0].mxu0
        %v695 = vadd.f32 0.0, %v694
        %v696 = vpop.f32.mrb[0].mxu0
        %v697 = vpop.f32.mrb[0].mxu0
        %v698 = vpop.f32.mrb[0].mxu0
        %699 = vdwg.mxu0
        %v700 = vadd.f32 %v529, %v695
        %701 = vst [vmem:[#allocation2] sm:$0xff] %v700
        // Predicated region
        $region57: #{tpu_custom_call.1} parent=39 // pred_check
          %p702 = pneg %p319
        $region58: #{tpu_custom_call.1} parent=39 // pred_check_branch
          %704 = sbr.rel (%p702) target = $region60
        $region59: #{tpu_custom_call.1} parent=39 // pred_region
          %v705 = vld [vmem:[#allocation2] sm:$0xff]
          %v706 = vld [vmem:[%s4] sm:$0x1]
          %v708 = vlaneseq
          %v709 = vshrl.u32 %v708, 7
          %v710 = vsub.s32 0, %v709
          %v711 = vrot.slane %v706, %v710
          %v713 = vadd.f32 %v705, %v711
          %714 = vst [vmem:[%s310] sm:$0xff] %v713
        $region60: #{tpu_custom_call.1} parent=39 // pred_fallthru
          _
        %s715 = sand.u32 %s168, 1
        %s716 = scalar_lea.sflag [#allocation5], %s715
        %s717 = sand.u32 %s168, 1
        %s718 = smul.addr %s717, 8
        %s719 = scalar_lea.vmem [#allocation9], %s718
        // Predicated region
        $region61: #{tpu_custom_call.1} parent=39 // pred_check
          %p720 = pneg %p178
        $region62: #{tpu_custom_call.1} parent=39 // pred_check_branch
          %722 = sbr.rel (%p720) target = $region64
        $region63: #{tpu_custom_call.1} parent=39 // pred_region
          %s724 = ssub.s32 128, 128
          %725 = vsyncadd %s716, %s724
          %s726 = smul.addr %s27, 128
          %s727 = scalar_lea.hbm %s5, %s726
          %s729 = sshll.u32 %s719, 4
          %s730 = int_to_ptr.vmem [resolvable:$true] %s729
          %732 = dma.vmem_to_hbm [thread:$0]  %s730, 128, %s727, %s716
        $region64: #{tpu_custom_call.1} parent=39 // pred_fallthru
          _
      $region40: #{tpu_custom_call.1} parent=5 // pred_fallthru
        _
      %p733 = scmp.le.s32.totalorder 2, %s18
      // Predicated region
      $region65: #{tpu_custom_call.1} parent=5 // pred_check
        %p734 = pneg %p733
      $region66: #{tpu_custom_call.1} parent=5 // pred_check_branch
        %736 = sbr.rel (%p734) target = $region68
      $region67: #{tpu_custom_call.1} parent=5 // pred_region
        %s737 = ssub.s32 %s18, 2
        // Predicated region
        $region69: #{tpu_custom_call.1} parent=67 // pred_check
          %p738 = pneg %p184
        $region70: #{tpu_custom_call.1} parent=67 // pred_check_branch
          %740 = sbr.rel (%p738) target = $region72
        $region71: #{tpu_custom_call.1} parent=67 // pred_region
          %s741 = sand.u32 %s169, 1
          %s742 = scalar_lea.sflag [#allocation5], %s741
          %s743 = sand.u32 %s169, 1
          %s744 = smul.addr %s743, 8
          %s745 = scalar_lea.vmem [#allocation9], %s744
          %746 = dma.done %s742, 128
        $region72: #{tpu_custom_call.1} parent=67 // pred_fallthru
          _
      $region68: #{tpu_custom_call.1} parent=5 // pred_fallthru
        _
    $region6: #{tpu_custom_call.1} parent=1 // loop_footer
      %s22 = sadd.s32 1, %s18
    $region7: #{tpu_custom_call.1} parent=1 // loop_footer_branch
      %17 = sbr.rel target = $region3
    $region8: #{tpu_custom_call.1} parent=1 // loop_exit
      _
    %747 = vsyncpa [#allocation4], 1
    %s748 = scalar_lea.sflag [#allocation4], 1
    %749 = vsyncpa %s748, 1
    %750 = vsyncpa [#allocation7], 1
    %751 = vsyncpa [#allocation5], 1
    %s752 = scalar_lea.sflag [#allocation5], 1
    %753 = vsyncpa %s752, 1

</llo_original>
